<compile_context>
chip_gen: v7x
topology: tpu7x:2x2x1
jax: 0.10.0
libtpu: 0.0.40
codegen_flags: <defaults>
</compile_context>

<pallas_src>
import functools

import jax
import jax.numpy as jnp
from jax import lax
from jax.experimental import pallas as pl
from jax.experimental.pallas import tpu as pltpu


def _round_up(x, m):
    return ((x + m - 1) // m) * m


def _pad_gates(x, h, h_pad):
    """Pad the last axis (3*h, gate order r,z,n) gate-wise to 3*h_pad."""
    pads = [(0, 0)] * (x.ndim - 1) + [(0, h_pad - h)]
    parts = [jnp.pad(x[..., g * h:(g + 1) * h], pads) for g in range(3)]
    return jnp.concatenate(parts, axis=-1)


def _vmem_limit_bytes():
    # ~85% of physical VMEM: v5e/v6e (128 MiB) -> ~100 MiB, v7x (64 MiB) -> ~54 MiB.
    try:
        cap = pltpu.get_tpu_info().vmem_capacity_bytes
        return int(min(100 * 1024 * 1024, int(cap * 0.85)))
    except Exception:
        return 32 * 1024 * 1024


# ----------------------------------------------------------------------------
# Fused kernel: GRU recurrence over a chunk of TT timesteps + FC (+ softmax)
# grid = (batch_blocks, time_chunks)
# ----------------------------------------------------------------------------
def gru_fc_kernel(gi_ref,     # (TT, B_blk, 3*Hp) bf16  input-side gate pre-acts
                  whh_ref,    # (Hp, 3*Hp)        bf16  W_hh.T (gate-padded)
                  bhhn_ref,   # (1, Hp)           f32   b_hh (n gate only)
                  fcw_ref,    # (Hp, Vp)          bf16  fc.weight.T
                  fcb_ref,    # (1, Vp)           f32   fc.bias
                  out_ref,    # (TT, B_blk, Vp)   f32
                  h_scratch,  # (B_blk, Hp)       f32   hidden carried across chunks
                  h_chunk,    # (TT, B_blk, Hp)   bf16  chunk hidden states for FC
                  *, h_pad, true_v, apply_softmax):
    Hp = h_pad
    TT, B_blk, _ = h_chunk.shape

    # h_0 = 0 (PyTorch default when no initial hidden state is passed)
    @pl.when(pl.program_id(1) == 0)
    def _():
        h_scratch[...] = jnp.zeros_like(h_scratch)

    whh = whh_ref[...]        # resident bf16 weight (constant across grid)
    bhh_n = bhhn_ref[...]     # (1, Hp) f32

    def step(tt, h):
        # Only the MXU operands are bf16; gate math stays f32 (v5e VPU/EUP).
        gi = gi_ref[tt].astype(jnp.float32)                        # (B_blk, 3Hp)
        gh = jnp.dot(h.astype(jnp.bfloat16), whh,
                     preferred_element_type=jnp.float32)           # (B_blk, 3Hp)
        # PyTorch gate order r, z, n  (slices are lane-tile aligned: Hp%128==0)
        r = jax.nn.sigmoid(gi[:, 0:Hp] + gh[:, 0:Hp])
        z = jax.nn.sigmoid(gi[:, Hp:2 * Hp] + gh[:, Hp:2 * Hp])
        n = jnp.tanh(gi[:, 2 * Hp:] + r * (gh[:, 2 * Hp:] + bhh_n))
        h_new = (1.0 - z) * n + z * h
        h_chunk[tt] = h_new.astype(jnp.bfloat16)
        return h_new

    h_last = lax.fori_loop(0, TT, step, h_scratch[...], unroll=True)
    h_scratch[...] = h_last

    # Fused FC over the whole chunk: one lane-dense (TT*B_blk, Hp) @ (Hp, Vp).
    hs = h_chunk[...].reshape(TT * B_blk, Hp)
    logits = jnp.dot(hs, fcw_ref[...],
                     preferred_element_type=jnp.float32) + fcb_ref[...]
    if apply_softmax:
        col = lax.broadcasted_iota(jnp.int32, logits.shape, 1)
        logits = jnp.where(col < true_v, logits, -1e30)   # mask padded vocab
        m = jnp.max(logits, axis=-1, keepdims=True)
        e = jnp.exp(logits - m)
        s = jnp.sum(e, axis=-1, keepdims=True)
        logits = e / s                                     # exact normalization
    out_ref[...] = logits.reshape(TT, B_blk, -1).astype(out_ref.dtype)


# ----------------------------------------------------------------------------
# Wrapper
# ----------------------------------------------------------------------------
@functools.partial(jax.jit, static_argnames=("apply_softmax",))
def surname_generation_forward(x_in, params, apply_softmax=False):
    """x_in: (B, T) int32 token ids  ->  (B, T, V) float32."""
    B, T = x_in.shape
    V, E = params["emb"].shape
    H = params["w_hh"].shape[1]
    f32, bf16 = jnp.float32, jnp.bfloat16

    Hp = _round_up(H, 128)            # lane-aligned hidden (per gate)
    Vp = _round_up(V, 128)            # lane-dense output
    G = 3 * Hp

    # --- batch blocking: multiple of 8, <=256 rows, >=2 blocks when possible ---
    Bp8 = _round_up(B, 8)
    B_blk = min(256, Bp8)
    if Bp8 > 8 and Bp8 // B_blk < 2:      # keep v7x's second TensorCore busy
        B_blk = max(8, _round_up(Bp8 // 2, 8))
    Bp = _round_up(Bp8, B_blk)

    # --- timestep chunking (amortize per-grid-step pipeline overhead) ---
    if T <= 32:
        TT = T
    else:
        TT = 8
        for cand in (32, 24, 16):         # largest chunk with <=25% T padding
            if _round_up(T, cand) - T <= T // 4:
                TT = cand
                break
    Tp = _round_up(T, TT)

    # --- pre-fold embedding + input projection + b_ih (+ b_hh for r,z gates) ---
    gi_table = params["emb"].astype(f32) @ params["w_ih"].astype(f32).T
    gi_table = gi_table + params["b_ih"]
    gi_table = gi_table.at[:, :2 * H].add(params["b_hh"][:2 * H])     # fold b_hr,b_hz
    gi_table = _pad_gates(gi_table, H, Hp).astype(bf16)               # (V, 3Hp)

    gi = jnp.take(gi_table, x_in.T, axis=0)                           # (T, B, 3Hp)
    gi = jnp.pad(gi, ((0, Tp - T), (0, Bp - B), (0, 0)))              # (Tp, Bp, 3Hp)

    whh = _pad_gates(params["w_hh"].T, H, Hp)                         # (H, 3Hp)
    whh = jnp.pad(whh, ((0, Hp - H), (0, 0))).astype(bf16)            # (Hp, 3Hp)
    bhh_n = jnp.pad(params["b_hh"][2 * H:], (0, Hp - H))[None, :].astype(f32)

    fcw = jnp.pad(params["fc_w"].T,
                  ((0, Hp - H), (0, Vp - V))).astype(bf16)            # (Hp, Vp)
    fcb = jnp.pad(params["fc_b"], (0, Vp - V))[None, :].astype(f32)   # (1, Vp)

    flops = 2 * Tp * Bp * Hp * G + 2 * Tp * Bp * Hp * Vp
    transc = Tp * Bp * 3 * Hp + (Tp * Bp * Vp if apply_softmax else 0)
    bytes_acc = (gi.size * 2 + Tp * Bp * Vp * 4
                 + (whh.size + fcw.size) * 2 + (Hp + Vp) * 4)

    out = pl.pallas_call(
        functools.partial(gru_fc_kernel, h_pad=Hp, true_v=V,
                          apply_softmax=apply_softmax),
        out_shape=jax.ShapeDtypeStruct((Tp, Bp, Vp), f32),
        grid=(Bp // B_blk, Tp // TT),
        in_specs=[
            pl.BlockSpec((TT, B_blk, G), lambda b, c: (c, b, 0)),
            # constant operands (index_map is constant); tiny here, so the
            # extra pipeline buffer is irrelevant and left at the default.
            pl.BlockSpec((Hp, G), lambda b, c: (0, 0)),
            pl.BlockSpec((1, Hp), lambda b, c: (0, 0)),
            pl.BlockSpec((Hp, Vp), lambda b, c: (0, 0)),
            pl.BlockSpec((1, Vp), lambda b, c: (0, 0)),
        ],
        out_specs=pl.BlockSpec((TT, B_blk, Vp), lambda b, c: (c, b, 0)),
        scratch_shapes=[
            pltpu.VMEM((B_blk, Hp), f32),         # hidden state across chunks
            pltpu.VMEM((TT, B_blk, Hp), bf16),    # chunk hidden states for FC
        ],
        compiler_params=pltpu.CompilerParams(
            dimension_semantics=("parallel", "arbitrary"),
            vmem_limit_bytes=_vmem_limit_bytes()),
        cost_estimate=pl.CostEstimate(flops=flops, transcendentals=transc,
                                      bytes_accessed=bytes_acc),
    )(gi, whh, bhh_n, fcw, fcb)

    # slice padded rows/lanes away BEFORE the transpose, then time-major ->
    # batch-major (matches PyTorch batch_first output).
    return jnp.transpose(out[:T, :B, :V], (1, 0, 2))                  # (B, T, V)


# ----------------------------------------------------------------------------
# Deterministic parameter init (PyTorch-style shapes / scales)
# ----------------------------------------------------------------------------
def make_params(key, char_vocab_size, char_embedding_size, rnn_hidden_size,
                padding_idx=0):
    V, E, H = char_vocab_size, char_embedding_size, rnn_hidden_size
    ks = jax.random.split(key, 7)
    emb = jax.random.normal(ks[0], (V, E), jnp.float32)
    emb = emb.at[padding_idx].set(0.0)                 # nn.Embedding padding_idx
    k = 1.0 / jnp.sqrt(jnp.float32(H))
    return {
        "emb":  emb,
        "w_ih": jax.random.uniform(ks[1], (3 * H, E), jnp.float32, -k, k),
        "w_hh": jax.random.uniform(ks[2], (3 * H, H), jnp.float32, -k, k),
        "b_ih": jax.random.uniform(ks[3], (3 * H,),   jnp.float32, -k, k),
        "b_hh": jax.random.uniform(ks[4], (3 * H,),   jnp.float32, -k, k),
        "fc_w": jax.random.uniform(ks[5], (V, H),     jnp.float32, -k, k),
        "fc_b": jax.random.uniform(ks[6], (V,),       jnp.float32, -k, k),
    }


# ----------------------------------------------------------------------------
# Pure-JAX f32 reference (same math as the PyTorch module, lax.scan)
# ----------------------------------------------------------------------------
def reference_forward(x_in, params, apply_softmax=False):
    H = params["w_hh"].shape[1]
    B, T = x_in.shape
    x_emb = jnp.take(params["emb"], x_in, axis=0)                  # (B, T, E)

    def step(h, x_t):
        gi = x_t @ params["w_ih"].T + params["b_ih"]
        gh = h @ params["w_hh"].T + params["b_hh"]
        r = jax.nn.sigmoid(gi[:, :H] + gh[:, :H])
        z = jax.nn.sigmoid(gi[:, H:2 * H] + gh[:, H:2 * H])
        n = jnp.tanh(gi[:, 2 * H:] + r * gh[:, 2 * H:])
        h_new = (1.0 - z) * n + z * h
        return h_new, h_new

    h0 = jnp.zeros((B, H), jnp.float32)
    _, ys = lax.scan(step, h0, jnp.transpose(x_emb, (1, 0, 2)))    # (T, B, H)
    ys = jnp.transpose(ys, (1, 0, 2)).reshape(B * T, H)
    y = ys @ params["fc_w"].T + params["fc_b"]
    if apply_softmax:
        y = jax.nn.softmax(y, axis=1)
    return y.reshape(B, T, -1)


if __name__ == "__main__":
    # small shapes consistent with the module's forward:
    #   x_in: (batch=2, seq=8) int token ids, vocab=32, emb=16, hidden=32
    B, T = 2, 8
    char_vocab_size, char_embedding_size, rnn_hidden_size = 32, 16, 32

    key = jax.random.PRNGKey(0)
    pkey, xkey = jax.random.split(key)
    params = make_params(pkey, char_vocab_size, char_embedding_size,
                         rnn_hidden_size)
    x_in = jax.random.randint(xkey, (B, T), 0, char_vocab_size, jnp.int32)

    # logits path
    out = jax.block_until_ready(
        surname_generation_forward(x_in, params, apply_softmax=False))
    ref = jax.block_until_ready(
        reference_forward(x_in, params, apply_softmax=False))
    assert out.shape == (B, T, char_vocab_size)
    # bf16 MXU operands / bf16 gi table (f32 accumulation) -> loosened tol
    assert jnp.allclose(out, ref, atol=3e-2, rtol=3e-2), \
        float(jnp.max(jnp.abs(out - ref)))

    # softmax path
    out_sm = jax.block_until_ready(
        surname_generation_forward(x_in, params, apply_softmax=True))
    ref_sm = reference_forward(x_in, params, apply_softmax=True)
    assert jnp.allclose(out_sm, ref_sm, atol=2e-2)
    assert jnp.allclose(jnp.sum(out_sm, axis=-1), 1.0, atol=1e-3)

    print("KERNEL_OK")
</pallas_src>

<mosaic_0001>
module attributes {stable_mosaic.version = 11 : i64} {
  func.func @gru_fc_kernel(%arg0: i32, %arg1: i32, %arg2: memref<8x8x384xbf16, #tpu.memory_space<vmem>>, %arg3: memref<128x384xbf16, #tpu.memory_space<vmem>>, %arg4: memref<1x128xf32, #tpu.memory_space<vmem>>, %arg5: memref<128x128xbf16, #tpu.memory_space<vmem>>, %arg6: memref<1x128xf32, #tpu.memory_space<vmem>>, %arg7: memref<8x8x128xf32, #tpu.memory_space<vmem>>, %arg8: memref<8x128xf32, #tpu.memory_space<vmem>>, %arg9: memref<8x8x128xbf16, #tpu.memory_space<vmem>>) attributes {dimension_semantics = [#tpu.dimension_semantics<parallel>, #tpu.dimension_semantics<arbitrary>], iteration_bounds = array<i64: 1, 1>, scalar_prefetch = 0 : i64, scratch_operands = 2 : i64, tpu.core_type = #tpu.core_type<tc>, window_params = [{transform_indices = @transform_0, window_bounds = array<i64: 8, 8, 384>}, {pipeline_mode = #tpu.pipeline_mode<synchronous>, transform_indices = @transform_1, window_bounds = array<i64: 128, 384>}, {pipeline_mode = #tpu.pipeline_mode<synchronous>, transform_indices = @transform_2, window_bounds = array<i64: 1, 128>}, {pipeline_mode = #tpu.pipeline_mode<synchronous>, transform_indices = @transform_3, window_bounds = array<i64: 128, 128>}, {pipeline_mode = #tpu.pipeline_mode<synchronous>, transform_indices = @transform_4, window_bounds = array<i64: 1, 128>}, {transform_indices = @transform_5, window_bounds = array<i64: 8, 8, 128>}]} {
    %c0_i32 = arith.constant 0 : i32
    %0 = arith.cmpi eq, %arg1, %c0_i32 : i32
    %1 = arith.extui %0 : i1 to i32
    %c0_i32_0 = arith.constant 0 : i32
    %2 = arith.cmpi ne, %1, %c0_i32_0 : i32
    scf.if %2 {
      %cst_83 = arith.constant 0.000000e+00 : f32
      %328 = vector.broadcast %cst_83 : f32 to vector<8x128xf32>
      %c0_84 = arith.constant 0 : index
      %c0_85 = arith.constant 0 : index
      %329 = vector.load %arg8[%c0_84, %c0_85] : memref<8x128xf32, #tpu.memory_space<vmem>>, vector<8x128xf32>
      tpu.vector_store %arg8[%c0_84, %c0_85], %328 {strides = array<i32>} : memref<8x128xf32, #tpu.memory_space<vmem>>, vector<8x128xf32>,
    } else {
    }
    %c0 = arith.constant 0 : index
    %c0_1 = arith.constant 0 : index
    %3 = vector.load %arg3[%c0, %c0_1] : memref<128x384xbf16, #tpu.memory_space<vmem>>, vector<128x384xbf16>
    %c0_2 = arith.constant 0 : index
    %c0_3 = arith.constant 0 : index
    %4 = vector.load %arg4[%c0_2, %c0_3] : memref<1x128xf32, #tpu.memory_space<vmem>>, vector<1x128xf32>
    %c0_4 = arith.constant 0 : index
    %c0_5 = arith.constant 0 : index
    %5 = vector.load %arg8[%c0_4, %c0_5] : memref<8x128xf32, #tpu.memory_space<vmem>>, vector<8x128xf32>
    %c0_i32_6 = arith.constant 0 : i32
    %6 = arith.index_cast %c0_i32_6 : i32 to index
    %c0_7 = arith.constant 0 : index
    %c0_8 = arith.constant 0 : index
    %7 = vector.load %arg2[%6, %c0_7, %c0_8] : memref<8x8x384xbf16, #tpu.memory_space<vmem>>, vector<1x8x384xbf16>
    %8 = vector.shape_cast %7 : vector<1x8x384xbf16> to vector<8x384xbf16>
    %9 = arith.extf %8 : vector<8x384xbf16> to vector<8x384xf32>
    %10 = arith.truncf %5 : vector<8x128xf32> to vector<8x128xbf16>
    %cst = arith.constant dense<0.000000e+00> : vector<8x384xf32>
    %11 = tpu.matmul %10, %3, %cst {dimension_numbers = #tpu.dot_dimension_numbers<[1], [0], [0], [1], [0, 0, 1, 1], [], []>} : vector<8x128xbf16>, vector<128x384xbf16>, vector<8x384xf32> -> vector<8x384xf32>
    %12 = vector.extract_strided_slice %9 {offsets = [0, 0], sizes = [8, 128], strides = [1, 1]} : vector<8x384xf32> to vector<8x128xf32>
    %13 = vector.extract_strided_slice %11 {offsets = [0, 0], sizes = [8, 128], strides = [1, 1]} : vector<8x384xf32> to vector<8x128xf32>
    %14 = arith.addf %12, %13 : vector<8x128xf32>
    %15 = arith.negf %14 : vector<8x128xf32>
    %16 = math.exp %15 : vector<8x128xf32>
    %cst_9 = arith.constant 1.000000e+00 : f32
    %17 = vector.broadcast %cst_9 : f32 to vector<8x128xf32>
    %18 = arith.addf %17, %16 : vector<8x128xf32>
    %19 = arith.divf %17, %18 : vector<8x128xf32>
    %20 = vector.extract_strided_slice %9 {offsets = [0, 128], sizes = [8, 128], strides = [1, 1]} : vector<8x384xf32> to vector<8x128xf32>
    %21 = vector.extract_strided_slice %11 {offsets = [0, 128], sizes = [8, 128], strides = [1, 1]} : vector<8x384xf32> to vector<8x128xf32>
    %22 = arith.addf %20, %21 : vector<8x128xf32>
    %23 = arith.negf %22 : vector<8x128xf32>
    %24 = math.exp %23 : vector<8x128xf32>
    %cst_10 = arith.constant 1.000000e+00 : f32
    %25 = vector.broadcast %cst_10 : f32 to vector<8x128xf32>
    %26 = arith.addf %25, %24 : vector<8x128xf32>
    %27 = arith.divf %25, %26 : vector<8x128xf32>
    %28 = vector.extract_strided_slice %9 {offsets = [0, 256], sizes = [8, 128], strides = [1, 1]} : vector<8x384xf32> to vector<8x128xf32>
    %29 = vector.extract_strided_slice %11 {offsets = [0, 256], sizes = [8, 128], strides = [1, 1]} : vector<8x384xf32> to vector<8x128xf32>
    %30 = vector.broadcast %4 : vector<1x128xf32> to vector<8x128xf32>
    %31 = arith.addf %29, %30 : vector<8x128xf32>
    %32 = arith.mulf %19, %31 : vector<8x128xf32>
    %33 = arith.addf %28, %32 : vector<8x128xf32>
    %34 = math.tanh %33 : vector<8x128xf32>
    %cst_11 = arith.constant 1.000000e+00 : f32
    %35 = vector.broadcast %cst_11 : f32 to vector<8x128xf32>
    %36 = arith.subf %35, %27 : vector<8x128xf32>
    %37 = arith.mulf %36, %34 : vector<8x128xf32>
    %38 = arith.mulf %27, %5 : vector<8x128xf32>
    %39 = arith.addf %37, %38 : vector<8x128xf32>
    %40 = arith.truncf %39 : vector<8x128xf32> to vector<8x128xbf16>
    %41 = arith.index_cast %c0_i32_6 : i32 to index
    %c0_12 = arith.constant 0 : index
    %c0_13 = arith.constant 0 : index
    %42 = vector.load %arg9[%41, %c0_12, %c0_13] : memref<8x8x128xbf16, #tpu.memory_space<vmem>>, vector<1x8x128xbf16>
    %43 = vector.shape_cast %42 : vector<1x8x128xbf16> to vector<8x128xbf16>
    %44 = vector.shape_cast %40 : vector<8x128xbf16> to vector<1x8x128xbf16>
    tpu.vector_store %arg9[%41, %c0_12, %c0_13], %44 {strides = array<i32>} : memref<8x8x128xbf16, #tpu.memory_space<vmem>>, vector<1x8x128xbf16>,
    %c1_i32 = arith.constant 1 : i32
    %45 = arith.index_cast %c1_i32 : i32 to index
    %c0_14 = arith.constant 0 : index
    %c0_15 = arith.constant 0 : index
    %46 = vector.load %arg2[%45, %c0_14, %c0_15] : memref<8x8x384xbf16, #tpu.memory_space<vmem>>, vector<1x8x384xbf16>
    %47 = vector.shape_cast %46 : vector<1x8x384xbf16> to vector<8x384xbf16>
    %48 = arith.extf %47 : vector<8x384xbf16> to vector<8x384xf32>
    %49 = arith.truncf %39 : vector<8x128xf32> to vector<8x128xbf16>
    %cst_16 = arith.constant dense<0.000000e+00> : vector<8x384xf32>
    %50 = tpu.matmul %49, %3, %cst_16 {dimension_numbers = #tpu.dot_dimension_numbers<[1], [0], [0], [1], [0, 0, 1, 1], [], []>} : vector<8x128xbf16>, vector<128x384xbf16>, vector<8x384xf32> -> vector<8x384xf32>
    %51 = vector.extract_strided_slice %48 {offsets = [0, 0], sizes = [8, 128], strides = [1, 1]} : vector<8x384xf32> to vector<8x128xf32>
    %52 = vector.extract_strided_slice %50 {offsets = [0, 0], sizes = [8, 128], strides = [1, 1]} : vector<8x384xf32> to vector<8x128xf32>
    %53 = arith.addf %51, %52 : vector<8x128xf32>
    %54 = arith.negf %53 : vector<8x128xf32>
    %55 = math.exp %54 : vector<8x128xf32>
    %cst_17 = arith.constant 1.000000e+00 : f32
    %56 = vector.broadcast %cst_17 : f32 to vector<8x128xf32>
    %57 = arith.addf %56, %55 : vector<8x128xf32>
    %58 = arith.divf %56, %57 : vector<8x128xf32>
    %59 = vector.extract_strided_slice %48 {offsets = [0, 128], sizes = [8, 128], strides = [1, 1]} : vector<8x384xf32> to vector<8x128xf32>
    %60 = vector.extract_strided_slice %50 {offsets = [0, 128], sizes = [8, 128], strides = [1, 1]} : vector<8x384xf32> to vector<8x128xf32>
    %61 = arith.addf %59, %60 : vector<8x128xf32>
    %62 = arith.negf %61 : vector<8x128xf32>
    %63 = math.exp %62 : vector<8x128xf32>
    %cst_18 = arith.constant 1.000000e+00 : f32
    %64 = vector.broadcast %cst_18 : f32 to vector<8x128xf32>
    %65 = arith.addf %64, %63 : vector<8x128xf32>
    %66 = arith.divf %64, %65 : vector<8x128xf32>
    %67 = vector.extract_strided_slice %48 {offsets = [0, 256], sizes = [8, 128], strides = [1, 1]} : vector<8x384xf32> to vector<8x128xf32>
    %68 = vector.extract_strided_slice %50 {offsets = [0, 256], sizes = [8, 128], strides = [1, 1]} : vector<8x384xf32> to vector<8x128xf32>
    %69 = vector.broadcast %4 : vector<1x128xf32> to vector<8x128xf32>
    %70 = arith.addf %68, %69 : vector<8x128xf32>
    %71 = arith.mulf %58, %70 : vector<8x128xf32>
    %72 = arith.addf %67, %71 : vector<8x128xf32>
    %73 = math.tanh %72 : vector<8x128xf32>
    %cst_19 = arith.constant 1.000000e+00 : f32
    %74 = vector.broadcast %cst_19 : f32 to vector<8x128xf32>
    %75 = arith.subf %74, %66 : vector<8x128xf32>
    %76 = arith.mulf %75, %73 : vector<8x128xf32>
    %77 = arith.mulf %66, %39 : vector<8x128xf32>
    %78 = arith.addf %76, %77 : vector<8x128xf32>
    %79 = arith.truncf %78 : vector<8x128xf32> to vector<8x128xbf16>
    %80 = arith.index_cast %c1_i32 : i32 to index
    %c0_20 = arith.constant 0 : index
    %c0_21 = arith.constant 0 : index
    %81 = vector.load %arg9[%80, %c0_20, %c0_21] : memref<8x8x128xbf16, #tpu.memory_space<vmem>>, vector<1x8x128xbf16>
    %82 = vector.shape_cast %81 : vector<1x8x128xbf16> to vector<8x128xbf16>
    %83 = vector.shape_cast %79 : vector<8x128xbf16> to vector<1x8x128xbf16>
    tpu.vector_store %arg9[%80, %c0_20, %c0_21], %83 {strides = array<i32>} : memref<8x8x128xbf16, #tpu.memory_space<vmem>>, vector<1x8x128xbf16>,
    %c2_i32 = arith.constant 2 : i32
    %84 = arith.index_cast %c2_i32 : i32 to index
    %c0_22 = arith.constant 0 : index
    %c0_23 = arith.constant 0 : index
    %85 = vector.load %arg2[%84, %c0_22, %c0_23] : memref<8x8x384xbf16, #tpu.memory_space<vmem>>, vector<1x8x384xbf16>
    %86 = vector.shape_cast %85 : vector<1x8x384xbf16> to vector<8x384xbf16>
    %87 = arith.extf %86 : vector<8x384xbf16> to vector<8x384xf32>
    %88 = arith.truncf %78 : vector<8x128xf32> to vector<8x128xbf16>
    %cst_24 = arith.constant dense<0.000000e+00> : vector<8x384xf32>
    %89 = tpu.matmul %88, %3, %cst_24 {dimension_numbers = #tpu.dot_dimension_numbers<[1], [0], [0], [1], [0, 0, 1, 1], [], []>} : vector<8x128xbf16>, vector<128x384xbf16>, vector<8x384xf32> -> vector<8x384xf32>
    %90 = vector.extract_strided_slice %87 {offsets = [0, 0], sizes = [8, 128], strides = [1, 1]} : vector<8x384xf32> to vector<8x128xf32>
    %91 = vector.extract_strided_slice %89 {offsets = [0, 0], sizes = [8, 128], strides = [1, 1]} : vector<8x384xf32> to vector<8x128xf32>
    %92 = arith.addf %90, %91 : vector<8x128xf32>
    %93 = arith.negf %92 : vector<8x128xf32>
    %94 = math.exp %93 : vector<8x128xf32>
    %cst_25 = arith.constant 1.000000e+00 : f32
    %95 = vector.broadcast %cst_25 : f32 to vector<8x128xf32>
    %96 = arith.addf %95, %94 : vector<8x128xf32>
    %97 = arith.divf %95, %96 : vector<8x128xf32>
    %98 = vector.extract_strided_slice %87 {offsets = [0, 128], sizes = [8, 128], strides = [1, 1]} : vector<8x384xf32> to vector<8x128xf32>
    %99 = vector.extract_strided_slice %89 {offsets = [0, 128], sizes = [8, 128], strides = [1, 1]} : vector<8x384xf32> to vector<8x128xf32>
    %100 = arith.addf %98, %99 : vector<8x128xf32>
    %101 = arith.negf %100 : vector<8x128xf32>
    %102 = math.exp %101 : vector<8x128xf32>
    %cst_26 = arith.constant 1.000000e+00 : f32
    %103 = vector.broadcast %cst_26 : f32 to vector<8x128xf32>
    %104 = arith.addf %103, %102 : vector<8x128xf32>
    %105 = arith.divf %103, %104 : vector<8x128xf32>
    %106 = vector.extract_strided_slice %87 {offsets = [0, 256], sizes = [8, 128], strides = [1, 1]} : vector<8x384xf32> to vector<8x128xf32>
    %107 = vector.extract_strided_slice %89 {offsets = [0, 256], sizes = [8, 128], strides = [1, 1]} : vector<8x384xf32> to vector<8x128xf32>
    %108 = vector.broadcast %4 : vector<1x128xf32> to vector<8x128xf32>
    %109 = arith.addf %107, %108 : vector<8x128xf32>
    %110 = arith.mulf %97, %109 : vector<8x128xf32>
    %111 = arith.addf %106, %110 : vector<8x128xf32>
    %112 = math.tanh %111 : vector<8x128xf32>
    %cst_27 = arith.constant 1.000000e+00 : f32
    %113 = vector.broadcast %cst_27 : f32 to vector<8x128xf32>
    %114 = arith.subf %113, %105 : vector<8x128xf32>
    %115 = arith.mulf %114, %112 : vector<8x128xf32>
    %116 = arith.mulf %105, %78 : vector<8x128xf32>
    %117 = arith.addf %115, %116 : vector<8x128xf32>
    %118 = arith.truncf %117 : vector<8x128xf32> to vector<8x128xbf16>
    %119 = arith.index_cast %c2_i32 : i32 to index
    %c0_28 = arith.constant 0 : index
    %c0_29 = arith.constant 0 : index
    %120 = vector.load %arg9[%119, %c0_28, %c0_29] : memref<8x8x128xbf16, #tpu.memory_space<vmem>>, vector<1x8x128xbf16>
    %121 = vector.shape_cast %120 : vector<1x8x128xbf16> to vector<8x128xbf16>
    %122 = vector.shape_cast %118 : vector<8x128xbf16> to vector<1x8x128xbf16>
    tpu.vector_store %arg9[%119, %c0_28, %c0_29], %122 {strides = array<i32>} : memref<8x8x128xbf16, #tpu.memory_space<vmem>>, vector<1x8x128xbf16>,
    %c3_i32 = arith.constant 3 : i32
    %123 = arith.index_cast %c3_i32 : i32 to index
    %c0_30 = arith.constant 0 : index
    %c0_31 = arith.constant 0 : index
    %124 = vector.load %arg2[%123, %c0_30, %c0_31] : memref<8x8x384xbf16, #tpu.memory_space<vmem>>, vector<1x8x384xbf16>
    %125 = vector.shape_cast %124 : vector<1x8x384xbf16> to vector<8x384xbf16>
    %126 = arith.extf %125 : vector<8x384xbf16> to vector<8x384xf32>
    %127 = arith.truncf %117 : vector<8x128xf32> to vector<8x128xbf16>
    %cst_32 = arith.constant dense<0.000000e+00> : vector<8x384xf32>
    %128 = tpu.matmul %127, %3, %cst_32 {dimension_numbers = #tpu.dot_dimension_numbers<[1], [0], [0], [1], [0, 0, 1, 1], [], []>} : vector<8x128xbf16>, vector<128x384xbf16>, vector<8x384xf32> -> vector<8x384xf32>
    %129 = vector.extract_strided_slice %126 {offsets = [0, 0], sizes = [8, 128], strides = [1, 1]} : vector<8x384xf32> to vector<8x128xf32>
    %130 = vector.extract_strided_slice %128 {offsets = [0, 0], sizes = [8, 128], strides = [1, 1]} : vector<8x384xf32> to vector<8x128xf32>
    %131 = arith.addf %129, %130 : vector<8x128xf32>
    %132 = arith.negf %131 : vector<8x128xf32>
    %133 = math.exp %132 : vector<8x128xf32>
    %cst_33 = arith.constant 1.000000e+00 : f32
    %134 = vector.broadcast %cst_33 : f32 to vector<8x128xf32>
    %135 = arith.addf %134, %133 : vector<8x128xf32>
    %136 = arith.divf %134, %135 : vector<8x128xf32>
    %137 = vector.extract_strided_slice %126 {offsets = [0, 128], sizes = [8, 128], strides = [1, 1]} : vector<8x384xf32> to vector<8x128xf32>
    %138 = vector.extract_strided_slice %128 {offsets = [0, 128], sizes = [8, 128], strides = [1, 1]} : vector<8x384xf32> to vector<8x128xf32>
    %139 = arith.addf %137, %138 : vector<8x128xf32>
    %140 = arith.negf %139 : vector<8x128xf32>
    %141 = math.exp %140 : vector<8x128xf32>
    %cst_34 = arith.constant 1.000000e+00 : f32
    %142 = vector.broadcast %cst_34 : f32 to vector<8x128xf32>
    %143 = arith.addf %142, %141 : vector<8x128xf32>
    %144 = arith.divf %142, %143 : vector<8x128xf32>
    %145 = vector.extract_strided_slice %126 {offsets = [0, 256], sizes = [8, 128], strides = [1, 1]} : vector<8x384xf32> to vector<8x128xf32>
    %146 = vector.extract_strided_slice %128 {offsets = [0, 256], sizes = [8, 128], strides = [1, 1]} : vector<8x384xf32> to vector<8x128xf32>
    %147 = vector.broadcast %4 : vector<1x128xf32> to vector<8x128xf32>
    %148 = arith.addf %146, %147 : vector<8x128xf32>
    %149 = arith.mulf %136, %148 : vector<8x128xf32>
    %150 = arith.addf %145, %149 : vector<8x128xf32>
    %151 = math.tanh %150 : vector<8x128xf32>
    %cst_35 = arith.constant 1.000000e+00 : f32
    %152 = vector.broadcast %cst_35 : f32 to vector<8x128xf32>
    %153 = arith.subf %152, %144 : vector<8x128xf32>
    %154 = arith.mulf %153, %151 : vector<8x128xf32>
    %155 = arith.mulf %144, %117 : vector<8x128xf32>
    %156 = arith.addf %154, %155 : vector<8x128xf32>
    %157 = arith.truncf %156 : vector<8x128xf32> to vector<8x128xbf16>
    %158 = arith.index_cast %c3_i32 : i32 to index
    %c0_36 = arith.constant 0 : index
    %c0_37 = arith.constant 0 : index
    %159 = vector.load %arg9[%158, %c0_36, %c0_37] : memref<8x8x128xbf16, #tpu.memory_space<vmem>>, vector<1x8x128xbf16>
    %160 = vector.shape_cast %159 : vector<1x8x128xbf16> to vector<8x128xbf16>
    %161 = vector.shape_cast %157 : vector<8x128xbf16> to vector<1x8x128xbf16>
    tpu.vector_store %arg9[%158, %c0_36, %c0_37], %161 {strides = array<i32>} : memref<8x8x128xbf16, #tpu.memory_space<vmem>>, vector<1x8x128xbf16>,
    %c4_i32 = arith.constant 4 : i32
    %162 = arith.index_cast %c4_i32 : i32 to index
    %c0_38 = arith.constant 0 : index
    %c0_39 = arith.constant 0 : index
    %163 = vector.load %arg2[%162, %c0_38, %c0_39] : memref<8x8x384xbf16, #tpu.memory_space<vmem>>, vector<1x8x384xbf16>
    %164 = vector.shape_cast %163 : vector<1x8x384xbf16> to vector<8x384xbf16>
    %165 = arith.extf %164 : vector<8x384xbf16> to vector<8x384xf32>
    %166 = arith.truncf %156 : vector<8x128xf32> to vector<8x128xbf16>
    %cst_40 = arith.constant dense<0.000000e+00> : vector<8x384xf32>
    %167 = tpu.matmul %166, %3, %cst_40 {dimension_numbers = #tpu.dot_dimension_numbers<[1], [0], [0], [1], [0, 0, 1, 1], [], []>} : vector<8x128xbf16>, vector<128x384xbf16>, vector<8x384xf32> -> vector<8x384xf32>
    %168 = vector.extract_strided_slice %165 {offsets = [0, 0], sizes = [8, 128], strides = [1, 1]} : vector<8x384xf32> to vector<8x128xf32>
    %169 = vector.extract_strided_slice %167 {offsets = [0, 0], sizes = [8, 128], strides = [1, 1]} : vector<8x384xf32> to vector<8x128xf32>
    %170 = arith.addf %168, %169 : vector<8x128xf32>
    %171 = arith.negf %170 : vector<8x128xf32>
    %172 = math.exp %171 : vector<8x128xf32>
    %cst_41 = arith.constant 1.000000e+00 : f32
    %173 = vector.broadcast %cst_41 : f32 to vector<8x128xf32>
    %174 = arith.addf %173, %172 : vector<8x128xf32>
    %175 = arith.divf %173, %174 : vector<8x128xf32>
    %176 = vector.extract_strided_slice %165 {offsets = [0, 128], sizes = [8, 128], strides = [1, 1]} : vector<8x384xf32> to vector<8x128xf32>
    %177 = vector.extract_strided_slice %167 {offsets = [0, 128], sizes = [8, 128], strides = [1, 1]} : vector<8x384xf32> to vector<8x128xf32>
    %178 = arith.addf %176, %177 : vector<8x128xf32>
    %179 = arith.negf %178 : vector<8x128xf32>
    %180 = math.exp %179 : vector<8x128xf32>
    %cst_42 = arith.constant 1.000000e+00 : f32
    %181 = vector.broadcast %cst_42 : f32 to vector<8x128xf32>
    %182 = arith.addf %181, %180 : vector<8x128xf32>
    %183 = arith.divf %181, %182 : vector<8x128xf32>
    %184 = vector.extract_strided_slice %165 {offsets = [0, 256], sizes = [8, 128], strides = [1, 1]} : vector<8x384xf32> to vector<8x128xf32>
    %185 = vector.extract_strided_slice %167 {offsets = [0, 256], sizes = [8, 128], strides = [1, 1]} : vector<8x384xf32> to vector<8x128xf32>
    %186 = vector.broadcast %4 : vector<1x128xf32> to vector<8x128xf32>
    %187 = arith.addf %185, %186 : vector<8x128xf32>
    %188 = arith.mulf %175, %187 : vector<8x128xf32>
    %189 = arith.addf %184, %188 : vector<8x128xf32>
    %190 = math.tanh %189 : vector<8x128xf32>
    %cst_43 = arith.constant 1.000000e+00 : f32
    %191 = vector.broadcast %cst_43 : f32 to vector<8x128xf32>
    %192 = arith.subf %191, %183 : vector<8x128xf32>
    %193 = arith.mulf %192, %190 : vector<8x128xf32>
    %194 = arith.mulf %183, %156 : vector<8x128xf32>
    %195 = arith.addf %193, %194 : vector<8x128xf32>
    %196 = arith.truncf %195 : vector<8x128xf32> to vector<8x128xbf16>
    %197 = arith.index_cast %c4_i32 : i32 to index
    %c0_44 = arith.constant 0 : index
    %c0_45 = arith.constant 0 : index
    %198 = vector.load %arg9[%197, %c0_44, %c0_45] : memref<8x8x128xbf16, #tpu.memory_space<vmem>>, vector<1x8x128xbf16>
    %199 = vector.shape_cast %198 : vector<1x8x128xbf16> to vector<8x128xbf16>
    %200 = vector.shape_cast %196 : vector<8x128xbf16> to vector<1x8x128xbf16>
    tpu.vector_store %arg9[%197, %c0_44, %c0_45], %200 {strides = array<i32>} : memref<8x8x128xbf16, #tpu.memory_space<vmem>>, vector<1x8x128xbf16>,
    %c5_i32 = arith.constant 5 : i32
    %201 = arith.index_cast %c5_i32 : i32 to index
    %c0_46 = arith.constant 0 : index
    %c0_47 = arith.constant 0 : index
    %202 = vector.load %arg2[%201, %c0_46, %c0_47] : memref<8x8x384xbf16, #tpu.memory_space<vmem>>, vector<1x8x384xbf16>
    %203 = vector.shape_cast %202 : vector<1x8x384xbf16> to vector<8x384xbf16>
    %204 = arith.extf %203 : vector<8x384xbf16> to vector<8x384xf32>
    %205 = arith.truncf %195 : vector<8x128xf32> to vector<8x128xbf16>
    %cst_48 = arith.constant dense<0.000000e+00> : vector<8x384xf32>
    %206 = tpu.matmul %205, %3, %cst_48 {dimension_numbers = #tpu.dot_dimension_numbers<[1], [0], [0], [1], [0, 0, 1, 1], [], []>} : vector<8x128xbf16>, vector<128x384xbf16>, vector<8x384xf32> -> vector<8x384xf32>
    %207 = vector.extract_strided_slice %204 {offsets = [0, 0], sizes = [8, 128], strides = [1, 1]} : vector<8x384xf32> to vector<8x128xf32>
    %208 = vector.extract_strided_slice %206 {offsets = [0, 0], sizes = [8, 128], strides = [1, 1]} : vector<8x384xf32> to vector<8x128xf32>
    %209 = arith.addf %207, %208 : vector<8x128xf32>
    %210 = arith.negf %209 : vector<8x128xf32>
    %211 = math.exp %210 : vector<8x128xf32>
    %cst_49 = arith.constant 1.000000e+00 : f32
    %212 = vector.broadcast %cst_49 : f32 to vector<8x128xf32>
    %213 = arith.addf %212, %211 : vector<8x128xf32>
    %214 = arith.divf %212, %213 : vector<8x128xf32>
    %215 = vector.extract_strided_slice %204 {offsets = [0, 128], sizes = [8, 128], strides = [1, 1]} : vector<8x384xf32> to vector<8x128xf32>
    %216 = vector.extract_strided_slice %206 {offsets = [0, 128], sizes = [8, 128], strides = [1, 1]} : vector<8x384xf32> to vector<8x128xf32>
    %217 = arith.addf %215, %216 : vector<8x128xf32>
    %218 = arith.negf %217 : vector<8x128xf32>
    %219 = math.exp %218 : vector<8x128xf32>
    %cst_50 = arith.constant 1.000000e+00 : f32
    %220 = vector.broadcast %cst_50 : f32 to vector<8x128xf32>
    %221 = arith.addf %220, %219 : vector<8x128xf32>
    %222 = arith.divf %220, %221 : vector<8x128xf32>
    %223 = vector.extract_strided_slice %204 {offsets = [0, 256], sizes = [8, 128], strides = [1, 1]} : vector<8x384xf32> to vector<8x128xf32>
    %224 = vector.extract_strided_slice %206 {offsets = [0, 256], sizes = [8, 128], strides = [1, 1]} : vector<8x384xf32> to vector<8x128xf32>
    %225 = vector.broadcast %4 : vector<1x128xf32> to vector<8x128xf32>
    %226 = arith.addf %224, %225 : vector<8x128xf32>
    %227 = arith.mulf %214, %226 : vector<8x128xf32>
    %228 = arith.addf %223, %227 : vector<8x128xf32>
    %229 = math.tanh %228 : vector<8x128xf32>
    %cst_51 = arith.constant 1.000000e+00 : f32
    %230 = vector.broadcast %cst_51 : f32 to vector<8x128xf32>
    %231 = arith.subf %230, %222 : vector<8x128xf32>
    %232 = arith.mulf %231, %229 : vector<8x128xf32>
    %233 = arith.mulf %222, %195 : vector<8x128xf32>
    %234 = arith.addf %232, %233 : vector<8x128xf32>
    %235 = arith.truncf %234 : vector<8x128xf32> to vector<8x128xbf16>
    %236 = arith.index_cast %c5_i32 : i32 to index
    %c0_52 = arith.constant 0 : index
    %c0_53 = arith.constant 0 : index
    %237 = vector.load %arg9[%236, %c0_52, %c0_53] : memref<8x8x128xbf16, #tpu.memory_space<vmem>>, vector<1x8x128xbf16>
    %238 = vector.shape_cast %237 : vector<1x8x128xbf16> to vector<8x128xbf16>
    %239 = vector.shape_cast %235 : vector<8x128xbf16> to vector<1x8x128xbf16>
    tpu.vector_store %arg9[%236, %c0_52, %c0_53], %239 {strides = array<i32>} : memref<8x8x128xbf16, #tpu.memory_space<vmem>>, vector<1x8x128xbf16>,
    %c6_i32 = arith.constant 6 : i32
    %240 = arith.index_cast %c6_i32 : i32 to index
    %c0_54 = arith.constant 0 : index
    %c0_55 = arith.constant 0 : index
    %241 = vector.load %arg2[%240, %c0_54, %c0_55] : memref<8x8x384xbf16, #tpu.memory_space<vmem>>, vector<1x8x384xbf16>
    %242 = vector.shape_cast %241 : vector<1x8x384xbf16> to vector<8x384xbf16>
    %243 = arith.extf %242 : vector<8x384xbf16> to vector<8x384xf32>
    %244 = arith.truncf %234 : vector<8x128xf32> to vector<8x128xbf16>
    %cst_56 = arith.constant dense<0.000000e+00> : vector<8x384xf32>
    %245 = tpu.matmul %244, %3, %cst_56 {dimension_numbers = #tpu.dot_dimension_numbers<[1], [0], [0], [1], [0, 0, 1, 1], [], []>} : vector<8x128xbf16>, vector<128x384xbf16>, vector<8x384xf32> -> vector<8x384xf32>
    %246 = vector.extract_strided_slice %243 {offsets = [0, 0], sizes = [8, 128], strides = [1, 1]} : vector<8x384xf32> to vector<8x128xf32>
    %247 = vector.extract_strided_slice %245 {offsets = [0, 0], sizes = [8, 128], strides = [1, 1]} : vector<8x384xf32> to vector<8x128xf32>
    %248 = arith.addf %246, %247 : vector<8x128xf32>
    %249 = arith.negf %248 : vector<8x128xf32>
    %250 = math.exp %249 : vector<8x128xf32>
    %cst_57 = arith.constant 1.000000e+00 : f32
    %251 = vector.broadcast %cst_57 : f32 to vector<8x128xf32>
    %252 = arith.addf %251, %250 : vector<8x128xf32>
    %253 = arith.divf %251, %252 : vector<8x128xf32>
    %254 = vector.extract_strided_slice %243 {offsets = [0, 128], sizes = [8, 128], strides = [1, 1]} : vector<8x384xf32> to vector<8x128xf32>
    %255 = vector.extract_strided_slice %245 {offsets = [0, 128], sizes = [8, 128], strides = [1, 1]} : vector<8x384xf32> to vector<8x128xf32>
    %256 = arith.addf %254, %255 : vector<8x128xf32>
    %257 = arith.negf %256 : vector<8x128xf32>
    %258 = math.exp %257 : vector<8x128xf32>
    %cst_58 = arith.constant 1.000000e+00 : f32
    %259 = vector.broadcast %cst_58 : f32 to vector<8x128xf32>
    %260 = arith.addf %259, %258 : vector<8x128xf32>
    %261 = arith.divf %259, %260 : vector<8x128xf32>
    %262 = vector.extract_strided_slice %243 {offsets = [0, 256], sizes = [8, 128], strides = [1, 1]} : vector<8x384xf32> to vector<8x128xf32>
    %263 = vector.extract_strided_slice %245 {offsets = [0, 256], sizes = [8, 128], strides = [1, 1]} : vector<8x384xf32> to vector<8x128xf32>
    %264 = vector.broadcast %4 : vector<1x128xf32> to vector<8x128xf32>
    %265 = arith.addf %263, %264 : vector<8x128xf32>
    %266 = arith.mulf %253, %265 : vector<8x128xf32>
    %267 = arith.addf %262, %266 : vector<8x128xf32>
    %268 = math.tanh %267 : vector<8x128xf32>
    %cst_59 = arith.constant 1.000000e+00 : f32
    %269 = vector.broadcast %cst_59 : f32 to vector<8x128xf32>
    %270 = arith.subf %269, %261 : vector<8x128xf32>
    %271 = arith.mulf %270, %268 : vector<8x128xf32>
    %272 = arith.mulf %261, %234 : vector<8x128xf32>
    %273 = arith.addf %271, %272 : vector<8x128xf32>
    %274 = arith.truncf %273 : vector<8x128xf32> to vector<8x128xbf16>
    %275 = arith.index_cast %c6_i32 : i32 to index
    %c0_60 = arith.constant 0 : index
    %c0_61 = arith.constant 0 : index
    %276 = vector.load %arg9[%275, %c0_60, %c0_61] : memref<8x8x128xbf16, #tpu.memory_space<vmem>>, vector<1x8x128xbf16>
    %277 = vector.shape_cast %276 : vector<1x8x128xbf16> to vector<8x128xbf16>
    %278 = vector.shape_cast %274 : vector<8x128xbf16> to vector<1x8x128xbf16>
    tpu.vector_store %arg9[%275, %c0_60, %c0_61], %278 {strides = array<i32>} : memref<8x8x128xbf16, #tpu.memory_space<vmem>>, vector<1x8x128xbf16>,
    %c7_i32 = arith.constant 7 : i32
    %279 = arith.index_cast %c7_i32 : i32 to index
    %c0_62 = arith.constant 0 : index
    %c0_63 = arith.constant 0 : index
    %280 = vector.load %arg2[%279, %c0_62, %c0_63] : memref<8x8x384xbf16, #tpu.memory_space<vmem>>, vector<1x8x384xbf16>
    %281 = vector.shape_cast %280 : vector<1x8x384xbf16> to vector<8x384xbf16>
    %282 = arith.extf %281 : vector<8x384xbf16> to vector<8x384xf32>
    %283 = arith.truncf %273 : vector<8x128xf32> to vector<8x128xbf16>
    %cst_64 = arith.constant dense<0.000000e+00> : vector<8x384xf32>
    %284 = tpu.matmul %283, %3, %cst_64 {dimension_numbers = #tpu.dot_dimension_numbers<[1], [0], [0], [1], [0, 0, 1, 1], [], []>} : vector<8x128xbf16>, vector<128x384xbf16>, vector<8x384xf32> -> vector<8x384xf32>
    %285 = vector.extract_strided_slice %282 {offsets = [0, 0], sizes = [8, 128], strides = [1, 1]} : vector<8x384xf32> to vector<8x128xf32>
    %286 = vector.extract_strided_slice %284 {offsets = [0, 0], sizes = [8, 128], strides = [1, 1]} : vector<8x384xf32> to vector<8x128xf32>
    %287 = arith.addf %285, %286 : vector<8x128xf32>
    %288 = arith.negf %287 : vector<8x128xf32>
    %289 = math.exp %288 : vector<8x128xf32>
    %cst_65 = arith.constant 1.000000e+00 : f32
    %290 = vector.broadcast %cst_65 : f32 to vector<8x128xf32>
    %291 = arith.addf %290, %289 : vector<8x128xf32>
    %292 = arith.divf %290, %291 : vector<8x128xf32>
    %293 = vector.extract_strided_slice %282 {offsets = [0, 128], sizes = [8, 128], strides = [1, 1]} : vector<8x384xf32> to vector<8x128xf32>
    %294 = vector.extract_strided_slice %284 {offsets = [0, 128], sizes = [8, 128], strides = [1, 1]} : vector<8x384xf32> to vector<8x128xf32>
    %295 = arith.addf %293, %294 : vector<8x128xf32>
    %296 = arith.negf %295 : vector<8x128xf32>
    %297 = math.exp %296 : vector<8x128xf32>
    %cst_66 = arith.constant 1.000000e+00 : f32
    %298 = vector.broadcast %cst_66 : f32 to vector<8x128xf32>
    %299 = arith.addf %298, %297 : vector<8x128xf32>
    %300 = arith.divf %298, %299 : vector<8x128xf32>
    %301 = vector.extract_strided_slice %282 {offsets = [0, 256], sizes = [8, 128], strides = [1, 1]} : vector<8x384xf32> to vector<8x128xf32>
    %302 = vector.extract_strided_slice %284 {offsets = [0, 256], sizes = [8, 128], strides = [1, 1]} : vector<8x384xf32> to vector<8x128xf32>
    %303 = vector.broadcast %4 : vector<1x128xf32> to vector<8x128xf32>
    %304 = arith.addf %302, %303 : vector<8x128xf32>
    %305 = arith.mulf %292, %304 : vector<8x128xf32>
    %306 = arith.addf %301, %305 : vector<8x128xf32>
    %307 = math.tanh %306 : vector<8x128xf32>
    %cst_67 = arith.constant 1.000000e+00 : f32
    %308 = vector.broadcast %cst_67 : f32 to vector<8x128xf32>
    %309 = arith.subf %308, %300 : vector<8x128xf32>
    %310 = arith.mulf %309, %307 : vector<8x128xf32>
    %311 = arith.mulf %300, %273 : vector<8x128xf32>
    %312 = arith.addf %310, %311 : vector<8x128xf32>
    %313 = arith.truncf %312 : vector<8x128xf32> to vector<8x128xbf16>
    %314 = arith.index_cast %c7_i32 : i32 to index
    %c0_68 = arith.constant 0 : index
    %c0_69 = arith.constant 0 : index
    %315 = vector.load %arg9[%314, %c0_68, %c0_69] : memref<8x8x128xbf16, #tpu.memory_space<vmem>>, vector<1x8x128xbf16>
    %316 = vector.shape_cast %315 : vector<1x8x128xbf16> to vector<8x128xbf16>
    %317 = vector.shape_cast %313 : vector<8x128xbf16> to vector<1x8x128xbf16>
    tpu.vector_store %arg9[%314, %c0_68, %c0_69], %317 {strides = array<i32>} : memref<8x8x128xbf16, #tpu.memory_space<vmem>>, vector<1x8x128xbf16>,
    %c8_i32 = arith.constant 8 : i32
    %c0_70 = arith.constant 0 : index
    %c0_71 = arith.constant 0 : index
    %318 = vector.load %arg8[%c0_70, %c0_71] : memref<8x128xf32, #tpu.memory_space<vmem>>, vector<8x128xf32>
    tpu.vector_store %arg8[%c0_70, %c0_71], %312 {strides = array<i32>} : memref<8x128xf32, #tpu.memory_space<vmem>>, vector<8x128xf32>,
    %c0_72 = arith.constant 0 : index
    %c0_73 = arith.constant 0 : index
    %c0_74 = arith.constant 0 : index
    %319 = vector.load %arg9[%c0_72, %c0_73, %c0_74] : memref<8x8x128xbf16, #tpu.memory_space<vmem>>, vector<8x8x128xbf16>
    %320 = vector.shape_cast %319 : vector<8x8x128xbf16> to vector<64x128xbf16>
    %c0_75 = arith.constant 0 : index
    %c0_76 = arith.constant 0 : index
    %321 = vector.load %arg5[%c0_75, %c0_76] : memref<128x128xbf16, #tpu.memory_space<vmem>>, vector<128x128xbf16>
    %cst_77 = arith.constant dense<0.000000e+00> : vector<64x128xf32>
    %322 = tpu.matmul %320, %321, %cst_77 {dimension_numbers = #tpu.dot_dimension_numbers<[1], [0], [0], [1], [0, 0, 1, 1], [], []>} : vector<64x128xbf16>, vector<128x128xbf16>, vector<64x128xf32> -> vector<64x128xf32>
    %c0_78 = arith.constant 0 : index
    %c0_79 = arith.constant 0 : index
    %323 = vector.load %arg6[%c0_78, %c0_79] : memref<1x128xf32, #tpu.memory_space<vmem>>, vector<1x128xf32>
    %324 = vector.broadcast %323 : vector<1x128xf32> to vector<64x128xf32>
    %325 = arith.addf %322, %324 : vector<64x128xf32>
    %326 = vector.shape_cast %325 : vector<64x128xf32> to vector<8x8x128xf32>
    %c0_80 = arith.constant 0 : index
    %c0_81 = arith.constant 0 : index
    %c0_82 = arith.constant 0 : index
    %327 = vector.load %arg7[%c0_80, %c0_81, %c0_82] : memref<8x8x128xf32, #tpu.memory_space<vmem>>, vector<8x8x128xf32>
    tpu.vector_store %arg7[%c0_80, %c0_81, %c0_82], %326 {strides = array<i32>} : memref<8x8x128xf32, #tpu.memory_space<vmem>>, vector<8x8x128xf32>,
    return
  }
  func.func @transform_0(%arg0: i32, %arg1: i32) -> (i32, i32, i32) {
    %c0_i32 = arith.constant 0 : i32
    %c0_i32_0 = arith.constant 0 : i32
    return %arg1, %arg0, %c0_i32 : i32, i32, i32
  }
  func.func @transform_1(%arg0: i32, %arg1: i32) -> (i32, i32) {
    %c0_i32 = arith.constant 0 : i32
    %c0_i32_0 = arith.constant 0 : i32
    %c0_i32_1 = arith.constant 0 : i32
    return %c0_i32, %c0_i32_0 : i32, i32
  }
  func.func @transform_2(%arg0: i32, %arg1: i32) -> (i32, i32) {
    %c0_i32 = arith.constant 0 : i32
    %c0_i32_0 = arith.constant 0 : i32
    %c0_i32_1 = arith.constant 0 : i32
    return %c0_i32, %c0_i32_0 : i32, i32
  }
  func.func @transform_3(%arg0: i32, %arg1: i32) -> (i32, i32) {
    %c0_i32 = arith.constant 0 : i32
    %c0_i32_0 = arith.constant 0 : i32
    %c0_i32_1 = arith.constant 0 : i32
    return %c0_i32, %c0_i32_0 : i32, i32
  }
  func.func @transform_4(%arg0: i32, %arg1: i32) -> (i32, i32) {
    %c0_i32 = arith.constant 0 : i32
    %c0_i32_0 = arith.constant 0 : i32
    %c0_i32_1 = arith.constant 0 : i32
    return %c0_i32, %c0_i32_0 : i32, i32
  }
  func.func @transform_5(%arg0: i32, %arg1: i32) -> (i32, i32, i32) {
    %c0_i32 = arith.constant 0 : i32
    %c0_i32_0 = arith.constant 0 : i32
    return %arg1, %arg0, %c0_i32 : i32, i32, i32
  }
}

</mosaic_0001>

<llo_original>
// kernel: surname_generation_forward.1
$region0: #{surname_generation_forward.1}
  #allocation0 [shape = 'u32[]', space=smem, size = 0x4, offset = 0x4, fixed_abs, tag = 'smem constant byte address 0x4 - core index']
  #allocation1 [shape = 'u32[144,128]{1,0:T(1,128)}', space=vmem, size = 0x12000, scoped, tag = 'internal scratch']
  #allocation2 [shape = 'f32[8,128]{1,0:T(8,128)}', space=vmem, size = 0x1000, scoped, tag = 'scratch operand']
  #allocation3 [shape = 'bf16[8,8,128]{2,1,0:T(8,128)(2,1)}', space=vmem, size = 0x4000, scoped, tag = 'scratch operand']
  %s0 = inlined_call_operand.vmem [shape: bf16[8,8,384], index: 0, kind: input, shape index: {}]
  %s1 = inlined_call_operand.vmem [shape: bf16[128,384], index: 1, kind: input, shape index: {}]
  %s2 = inlined_call_operand.vmem [shape: f32[1,128], index: 2, kind: input, shape index: {}]
  %s3 = inlined_call_operand.vmem [shape: bf16[128,128], index: 3, kind: input, shape index: {}]
  %s4 = inlined_call_operand.vmem [shape: f32[1,128], index: 4, kind: input, shape index: {}]
  %s5 = inlined_call_operand.vmem [shape: f32[8,8,128], index: 5, kind: output, shape index: {}]
  %s6 = sld [smem:[#allocation0]]
  $region34: #{surname_generation_forward.1} parent=0
    _
  %s8 = ssub.s32 1, %s6
  %s9 = scalar_select 0, %s8, %s6
  // Predicated region
  $region2: #{surname_generation_forward.1} parent=0 // pred_check
    _
  $region3: #{surname_generation_forward.1} parent=0 // pred_check_branch
    %11 = sbr.rel (0) target = $region5
  $region4: #{surname_generation_forward.1} parent=0 // pred_region
    _
  $region5: #{surname_generation_forward.1} parent=0 // pred_fallthru
    _
  // Predicated region
  $region6: #{surname_generation_forward.1} parent=0 // pred_check
    _
  $region7: #{surname_generation_forward.1} parent=0 // pred_check_branch
    %13 = sbr.rel (0) target = $region9
  $region8: #{surname_generation_forward.1} parent=0 // pred_region
    _
  $region9: #{surname_generation_forward.1} parent=0 // pred_fallthru
    _
  // Predicated region
  $region10: #{surname_generation_forward.1} parent=0 // pred_check
    _
  $region11: #{surname_generation_forward.1} parent=0 // pred_check_branch
    %15 = sbr.rel (0) target = $region13
  $region12: #{surname_generation_forward.1} parent=0 // pred_region
    _
  $region13: #{surname_generation_forward.1} parent=0 // pred_fallthru
    _
  // Predicated region
  $region14: #{surname_generation_forward.1} parent=0 // pred_check
    _
  $region15: #{surname_generation_forward.1} parent=0 // pred_check_branch
    %17 = sbr.rel (0) target = $region17
  $region16: #{surname_generation_forward.1} parent=0 // pred_region
    _
  $region17: #{surname_generation_forward.1} parent=0 // pred_fallthru
    _
  // Predicated region
  $region18: #{surname_generation_forward.1} parent=0 // pred_check
    _
  $region19: #{surname_generation_forward.1} parent=0 // pred_check_branch
    %19 = sbr.rel (0) target = $region21
  $region20: #{surname_generation_forward.1} parent=0 // pred_region
    _
  $region21: #{surname_generation_forward.1} parent=0 // pred_fallthru
    _
  %p21 = scmp.eq.s32.totalorder 0, 0
  // Predicated region
  $region22: #{surname_generation_forward.1} parent=0 // pred_check
    %p22 = pneg %p21
  $region23: #{surname_generation_forward.1} parent=0 // pred_check_branch
    %24 = sbr.rel (%p22) target = $region25
  $region24: #{surname_generation_forward.1} parent=0 // pred_region
    %25 = vst [vmem:[#allocation2] sm:$0xff] 0.0
  $region25: #{surname_generation_forward.1} parent=0 // pred_fallthru
    _
  %v26 = vld [vmem:[%s1] sm:$0xff]
  %v27 = vld [vmem:[%s1 + $0x8] sm:$0xf]
  %v28 = vld [vmem:[%s1 + $0xc] sm:$0xff]
  %v29 = vld [vmem:[%s1 + $0x14] sm:$0xf]
  %v30 = vld [vmem:[%s1 + $0x18] sm:$0xff]
  %v31 = vld [vmem:[%s1 + $0x20] sm:$0xf]
  %v32 = vld [vmem:[%s1 + $0x24] sm:$0xff]
  %v33 = vld [vmem:[%s1 + $0x2c] sm:$0xf]
  %v34 = vld [vmem:[%s1 + $0x30] sm:$0xff]
  %v35 = vld [vmem:[%s1 + $0x38] sm:$0xf]
  %v36 = vld [vmem:[%s1 + $0x3c] sm:$0xff]
  %v37 = vld [vmem:[%s1 + $0x44] sm:$0xf]
  %v38 = vld [vmem:[%s1 + $0x48] sm:$0xff]
  %v39 = vld [vmem:[%s1 + $0x50] sm:$0xf]
  %v40 = vld [vmem:[%s1 + $0x54] sm:$0xff]
  %v41 = vld [vmem:[%s1 + $0x5c] sm:$0xf]
  %v42 = vld [vmem:[%s1 + $0x60] sm:$0xff]
  %v43 = vld [vmem:[%s1 + $0x68] sm:$0xf]
  %v44 = vld [vmem:[%s1 + $0x6c] sm:$0xff]
  %v45 = vld [vmem:[%s1 + $0x74] sm:$0xf]
  %v46 = vld [vmem:[%s1 + $0x78] sm:$0xff]
  %v47 = vld [vmem:[%s1 + $0x80] sm:$0xf]
  %v48 = vld [vmem:[%s1 + $0x84] sm:$0xff]
  %v49 = vld [vmem:[%s1 + $0x8c] sm:$0xf]
  %v50 = vld [vmem:[%s1 + $0x90] sm:$0xff]
  %v51 = vld [vmem:[%s1 + $0x98] sm:$0xf]
  %v52 = vld [vmem:[%s1 + $0x9c] sm:$0xff]
  %v53 = vld [vmem:[%s1 + $0xa4] sm:$0xf]
  %v54 = vld [vmem:[%s1 + $0xa8] sm:$0xff]
  %v55 = vld [vmem:[%s1 + $0xb0] sm:$0xf]
  %v56 = vld [vmem:[%s1 + $0xb4] sm:$0xff]
  %v57 = vld [vmem:[%s1 + $0xbc] sm:$0xf]
  %v58 = vld [vmem:[%s2] sm:$0x1]
  %v59 = vld [vmem:[#allocation2] sm:$0xff]
  %v60 = vld [vmem:[%s0] sm:$0xff]
  %v61 = vld [vmem:[%s0 + $0x8] sm:$0xf]
  %v62 = vunpack.c.l.bf16 %v60
  %v63 = vunpack.c.h.bf16 %v60
  %v64 = vunpack.c.l.bf16 %v61
  %v65 = vpack.c.bf16 %v59, %v59
  %v98 = vunpack.c.l.b16 %v26
  %v99 = vunpack.c.h.b16 %v26
  %v100 = vunpack.c.l.b16 %v27
  %v101 = vunpack.c.l.b16 %v28
  %v102 = vunpack.c.h.b16 %v28
  %v103 = vunpack.c.l.b16 %v29
  %v104 = vunpack.c.l.b16 %v30
  %v105 = vunpack.c.h.b16 %v30
  %v106 = vunpack.c.l.b16 %v31
  %v107 = vunpack.c.l.b16 %v32
  %v108 = vunpack.c.h.b16 %v32
  %v109 = vunpack.c.l.b16 %v33
  %v110 = vunpack.c.l.b16 %v34
  %v111 = vunpack.c.h.b16 %v34
  %v112 = vunpack.c.l.b16 %v35
  %v113 = vunpack.c.l.b16 %v36
  %v114 = vunpack.c.h.b16 %v36
  %v115 = vunpack.c.l.b16 %v37
  %v116 = vunpack.c.l.b16 %v38
  %v117 = vunpack.c.h.b16 %v38
  %v118 = vunpack.c.l.b16 %v39
  %v119 = vunpack.c.l.b16 %v40
  %v120 = vunpack.c.h.b16 %v40
  %v121 = vunpack.c.l.b16 %v41
  %v122 = vunpack.c.l.b16 %v42
  %v123 = vunpack.c.h.b16 %v42
  %v124 = vunpack.c.l.b16 %v43
  %v125 = vunpack.c.l.b16 %v44
  %v126 = vunpack.c.h.b16 %v44
  %v127 = vunpack.c.l.b16 %v45
  %v128 = vunpack.c.l.b16 %v46
  %v129 = vunpack.c.h.b16 %v46
  %v130 = vunpack.c.l.b16 %v47
  %v131 = vunpack.c.l.b16 %v48
  %v132 = vunpack.c.h.b16 %v48
  %v133 = vunpack.c.l.b16 %v49
  %v134 = vunpack.c.l.b16 %v50
  %v135 = vunpack.c.h.b16 %v50
  %v136 = vunpack.c.l.b16 %v51
  %v137 = vunpack.c.l.b16 %v52
  %v138 = vunpack.c.h.b16 %v52
  %v139 = vunpack.c.l.b16 %v53
  %v140 = vunpack.c.l.b16 %v54
  %v141 = vunpack.c.h.b16 %v54
  %v142 = vunpack.c.l.b16 %v55
  %v143 = vunpack.c.l.b16 %v56
  %v144 = vunpack.c.h.b16 %v56
  %v145 = vunpack.c.l.b16 %v57
  %v146 = vpack.c.b16 %v101, %v98
  %v147 = vpack.c.b16 %v102, %v99
  %v148 = vpack.c.b16 %v103, %v100
  %v149 = vpack.c.b16 %v107, %v104
  %v150 = vpack.c.b16 %v108, %v105
  %v151 = vpack.c.b16 %v109, %v106
  %v152 = vpack.c.b16 %v113, %v110
  %v153 = vpack.c.b16 %v114, %v111
  %v154 = vpack.c.b16 %v115, %v112
  %v155 = vpack.c.b16 %v119, %v116
  %v156 = vpack.c.b16 %v120, %v117
  %v157 = vpack.c.b16 %v121, %v118
  %v158 = vpack.c.b16 %v125, %v122
  %v159 = vpack.c.b16 %v126, %v123
  %v160 = vpack.c.b16 %v127, %v124
  %v161 = vpack.c.b16 %v131, %v128
  %v162 = vpack.c.b16 %v132, %v129
  %v163 = vpack.c.b16 %v133, %v130
  %v164 = vpack.c.b16 %v137, %v134
  %v165 = vpack.c.b16 %v138, %v135
  %v166 = vpack.c.b16 %v139, %v136
  %v167 = vpack.c.b16 %v143, %v140
  %v168 = vpack.c.b16 %v144, %v141
  %v169 = vpack.c.b16 %v145, %v142
  %194 = vmatprep.subr.bf16.mxu0 %v147
  %195 = vmatpush1.bf16.msra.mxu0 %v146
  %196 = vmatprep.subr.bf16.mxu0 %v150
  %197 = vmatpush1.bf16.msra.mxu0 %v149
  %198 = vmatprep.subr.bf16.mxu0 %v153
  %199 = vmatpush1.bf16.msra.mxu0 %v152
  %200 = vmatprep.subr.bf16.mxu0 %v156
  %201 = vmatpush1.bf16.msra.mxu0 %v155
  %202 = vmatprep.subr.bf16.mxu0 %v159
  %203 = vmatpush1.bf16.msra.mxu0 %v158
  %204 = vmatprep.subr.bf16.mxu0 %v162
  %205 = vmatpush1.bf16.msra.mxu0 %v161
  %206 = vmatprep.subr.bf16.mxu0 %v165
  %207 = vmatpush1.bf16.msra.mxu0 %v164
  %208 = vmatprep.subr.bf16.mxu0 %v168
  %209 = vmatpush1.bf16.msra.mxu0 %v167
  %210 = vmatprep.subr.bf16.mxu0 0
  %211 = vmatpush1.bf16.msra.mxu0 0
  %212 = vmatprep.subr.bf16.mxu0 0
  %213 = vmatpush1.bf16.msra.mxu0 0
  %214 = vmatprep.subr.bf16.mxu0 0
  %215 = vmatpush1.bf16.msra.mxu0 0
  %216 = vmatprep.subr.bf16.mxu0 0
  %217 = vmatpush1.bf16.msra.mxu0 0
  %218 = vmatprep.subr.bf16.mxu0 0
  %219 = vmatpush1.bf16.msra.mxu0 0
  %220 = vmatprep.subr.bf16.mxu0 0
  %221 = vmatpush1.bf16.msra.mxu0 0
  %222 = vmatprep.subr.bf16.mxu0 0
  %223 = vmatpush1.bf16.msra.mxu0 0
  %224 = vmatprep.subr.bf16.mxu0 0
  %225 = vmatpush1.bf16.msra.mxu0 0
  %226 = vmatprep.mubr.bf16.mxu0 0
  %227 = vmatmul.mubr.bf16.gmra.mrb[0].mxu0 %v65
  %v228 = vpop.f32.mrb[0].mxu0
  %v229 = vadd.f32 0.0, %v228
  %v230 = vpop.f32.mrb[0].mxu0
  %v231 = vadd.f32 0.0, %v230
  %v232 = vpop.f32.mrb[0].mxu0
  %v233 = vpop.f32.mrb[0].mxu0
  %234 = vdwg.mxu0
  %235 = vmatprep.subr.bf16.mxu0 0
  %236 = vmatpush1.bf16.msra.mxu0 %v148
  %237 = vmatprep.subr.bf16.mxu0 0
  %238 = vmatpush1.bf16.msra.mxu0 %v151
  %239 = vmatprep.subr.bf16.mxu0 0
  %240 = vmatpush1.bf16.msra.mxu0 %v154
  %241 = vmatprep.subr.bf16.mxu0 0
  %242 = vmatpush1.bf16.msra.mxu0 %v157
  %243 = vmatprep.subr.bf16.mxu0 0
  %244 = vmatpush1.bf16.msra.mxu0 %v160
  %245 = vmatprep.subr.bf16.mxu0 0
  %246 = vmatpush1.bf16.msra.mxu0 %v163
  %247 = vmatprep.subr.bf16.mxu0 0
  %248 = vmatpush1.bf16.msra.mxu0 %v166
  %249 = vmatprep.subr.bf16.mxu0 0
  %250 = vmatpush1.bf16.msra.mxu0 %v169
  %251 = vmatprep.subr.bf16.mxu0 0
  %252 = vmatpush1.bf16.msra.mxu0 0
  %253 = vmatprep.subr.bf16.mxu0 0
  %254 = vmatpush1.bf16.msra.mxu0 0
  %255 = vmatprep.subr.bf16.mxu0 0
  %256 = vmatpush1.bf16.msra.mxu0 0
  %257 = vmatprep.subr.bf16.mxu0 0
  %258 = vmatpush1.bf16.msra.mxu0 0
  %259 = vmatprep.subr.bf16.mxu0 0
  %260 = vmatpush1.bf16.msra.mxu0 0
  %261 = vmatprep.subr.bf16.mxu0 0
  %262 = vmatpush1.bf16.msra.mxu0 0
  %263 = vmatprep.subr.bf16.mxu0 0
  %264 = vmatpush1.bf16.msra.mxu0 0
  %265 = vmatprep.subr.bf16.mxu0 0
  %266 = vmatpush1.bf16.msra.mxu0 0
  %267 = vmatprep.mubr.bf16.mxu0 0
  %268 = vmatmul.mubr.bf16.gmra.mrb[0].mxu0 %v65
  %v269 = vpop.f32.mrb[0].mxu0
  %v270 = vadd.f32 0.0, %v269
  %v271 = vpop.f32.mrb[0].mxu0
  %v272 = vpop.f32.mrb[0].mxu0
  %v273 = vpop.f32.mrb[0].mxu0
  %274 = vdwg.mxu0
  %v275 = vadd.f32 %v62, %v229
  %v276 = vxor.u32 %v275, 2147483648
  %v277 = vmul.f32 %v276, 1.442695
  %v278 = vpow.pop %v277
  %v279 = vadd.f32 %v278, 1.0
  %v280 = vrcp.pop %v279
  %v281 = vmul.f32 1.0, %v280
  %v282 = vadd.f32 %v63, %v231
  %v283 = vxor.u32 %v282, 2147483648
  %v284 = vmul.f32 %v283, 1.442695
  %v285 = vpow.pop %v284
  %v286 = vadd.f32 %v285, 1.0
  %v287 = vrcp.pop %v286
  %v288 = vmul.f32 1.0, %v287
  %v290 = vlaneseq
  %v291 = vshrl.u32 %v290, 7
  %v292 = vsub.s32 0, %v291
  %v293 = vrot.slane %v58, %v292
  %v295 = vadd.f32 %v270, %v293
  %v296 = vmul.f32 %v281, %v295
  %v297 = vadd.f32 %v64, %v296
  %v298 = vtanh.pop %v297
  %v299 = vsub.f32 1.0, %v288
  %v300 = vmul.f32 %v299, %v298
  %v301 = vmul.f32 %v288, %v59
  %v302 = vadd.f32 %v300, %v301
  %v303 = vpack.c.bf16 %v302, %v302
  %304 = vst [vmem:[#allocation3] sm:$0xf] %v303
  %s305 = scalar_lea.vmem %s0, 12
  %v306 = vld [vmem:[%s305] sm:$0xff]
  %v307 = vld [vmem:[%s305 + $0x8] sm:$0xf]
  %v308 = vunpack.c.l.bf16 %v306
  %v309 = vunpack.c.h.bf16 %v306
  %v310 = vunpack.c.l.bf16 %v307
  %311 = vmatprep.subr.bf16.mxu0 %v147
  %312 = vmatpush1.bf16.msra.mxu0 %v146
  %313 = vmatprep.subr.bf16.mxu0 %v150
  %314 = vmatpush1.bf16.msra.mxu0 %v149
  %315 = vmatprep.subr.bf16.mxu0 %v153
  %316 = vmatpush1.bf16.msra.mxu0 %v152
  %317 = vmatprep.subr.bf16.mxu0 %v156
  %318 = vmatpush1.bf16.msra.mxu0 %v155
  %319 = vmatprep.subr.bf16.mxu0 %v159
  %320 = vmatpush1.bf16.msra.mxu0 %v158
  %321 = vmatprep.subr.bf16.mxu0 %v162
  %322 = vmatpush1.bf16.msra.mxu0 %v161
  %323 = vmatprep.subr.bf16.mxu0 %v165
  %324 = vmatpush1.bf16.msra.mxu0 %v164
  %325 = vmatprep.subr.bf16.mxu0 %v168
  %326 = vmatpush1.bf16.msra.mxu0 %v167
  %327 = vmatprep.subr.bf16.mxu0 0
  %328 = vmatpush1.bf16.msra.mxu0 0
  %329 = vmatprep.subr.bf16.mxu0 0
  %330 = vmatpush1.bf16.msra.mxu0 0
  %331 = vmatprep.subr.bf16.mxu0 0
  %332 = vmatpush1.bf16.msra.mxu0 0
  %333 = vmatprep.subr.bf16.mxu0 0
  %334 = vmatpush1.bf16.msra.mxu0 0
  %335 = vmatprep.subr.bf16.mxu0 0
  %336 = vmatpush1.bf16.msra.mxu0 0
  %337 = vmatprep.subr.bf16.mxu0 0
  %338 = vmatpush1.bf16.msra.mxu0 0
  %339 = vmatprep.subr.bf16.mxu0 0
  %340 = vmatpush1.bf16.msra.mxu0 0
  %341 = vmatprep.subr.bf16.mxu0 0
  %342 = vmatpush1.bf16.msra.mxu0 0
  %343 = vmatprep.mubr.bf16.mxu0 0
  %344 = vmatmul.mubr.bf16.gmra.mrb[0].mxu0 %v303
  %v345 = vpop.f32.mrb[0].mxu0
  %v346 = vadd.f32 0.0, %v345
  %v347 = vpop.f32.mrb[0].mxu0
  %v348 = vadd.f32 0.0, %v347
  %v349 = vpop.f32.mrb[0].mxu0
  %v350 = vpop.f32.mrb[0].mxu0
  %351 = vdwg.mxu0
  %352 = vmatprep.subr.bf16.mxu0 0
  %353 = vmatpush1.bf16.msra.mxu0 %v148
  %354 = vmatprep.subr.bf16.mxu0 0
  %355 = vmatpush1.bf16.msra.mxu0 %v151
  %356 = vmatprep.subr.bf16.mxu0 0
  %357 = vmatpush1.bf16.msra.mxu0 %v154
  %358 = vmatprep.subr.bf16.mxu0 0
  %359 = vmatpush1.bf16.msra.mxu0 %v157
  %360 = vmatprep.subr.bf16.mxu0 0
  %361 = vmatpush1.bf16.msra.mxu0 %v160
  %362 = vmatprep.subr.bf16.mxu0 0
  %363 = vmatpush1.bf16.msra.mxu0 %v163
  %364 = vmatprep.subr.bf16.mxu0 0
  %365 = vmatpush1.bf16.msra.mxu0 %v166
  %366 = vmatprep.subr.bf16.mxu0 0
  %367 = vmatpush1.bf16.msra.mxu0 %v169
  %368 = vmatprep.subr.bf16.mxu0 0
  %369 = vmatpush1.bf16.msra.mxu0 0
  %370 = vmatprep.subr.bf16.mxu0 0
  %371 = vmatpush1.bf16.msra.mxu0 0
  %372 = vmatprep.subr.bf16.mxu0 0
  %373 = vmatpush1.bf16.msra.mxu0 0
  %374 = vmatprep.subr.bf16.mxu0 0
  %375 = vmatpush1.bf16.msra.mxu0 0
  %376 = vmatprep.subr.bf16.mxu0 0
  %377 = vmatpush1.bf16.msra.mxu0 0
  %378 = vmatprep.subr.bf16.mxu0 0
  %379 = vmatpush1.bf16.msra.mxu0 0
  %380 = vmatprep.subr.bf16.mxu0 0
  %381 = vmatpush1.bf16.msra.mxu0 0
  %382 = vmatprep.subr.bf16.mxu0 0
  %383 = vmatpush1.bf16.msra.mxu0 0
  %384 = vmatprep.mubr.bf16.mxu0 0
  %385 = vmatmul.mubr.bf16.gmra.mrb[0].mxu0 %v303
  %v386 = vpop.f32.mrb[0].mxu0
  %v387 = vadd.f32 0.0, %v386
  %v388 = vpop.f32.mrb[0].mxu0
  %v389 = vpop.f32.mrb[0].mxu0
  %v390 = vpop.f32.mrb[0].mxu0
  %391 = vdwg.mxu0
  %v392 = vadd.f32 %v308, %v346
  %v393 = vxor.u32 %v392, 2147483648
  %v394 = vmul.f32 %v393, 1.442695
  %v395 = vpow.pop %v394
  %v396 = vadd.f32 %v395, 1.0
  %v397 = vrcp.pop %v396
  %v398 = vmul.f32 1.0, %v397
  %v399 = vadd.f32 %v309, %v348
  %v400 = vxor.u32 %v399, 2147483648
  %v401 = vmul.f32 %v400, 1.442695
  %v402 = vpow.pop %v401
  %v403 = vadd.f32 %v402, 1.0
  %v404 = vrcp.pop %v403
  %v405 = vmul.f32 1.0, %v404
  %v406 = vadd.f32 %v387, %v293
  %v407 = vmul.f32 %v398, %v406
  %v408 = vadd.f32 %v310, %v407
  %v409 = vtanh.pop %v408
  %v410 = vsub.f32 1.0, %v405
  %v411 = vmul.f32 %v410, %v409
  %v412 = vmul.f32 %v405, %v302
  %v413 = vadd.f32 %v411, %v412
  %v414 = vpack.c.bf16 %v413, %v413
  %s415 = scalar_lea.vmem [#allocation3], 4
  %416 = vst [vmem:[%s415] sm:$0xf] %v414
  %s417 = scalar_lea.vmem %s0, 24
  %v418 = vld [vmem:[%s417] sm:$0xff]
  %v419 = vld [vmem:[%s417 + $0x8] sm:$0xf]
  %v420 = vunpack.c.l.bf16 %v418
  %v421 = vunpack.c.h.bf16 %v418
  %v422 = vunpack.c.l.bf16 %v419
  %423 = vmatprep.subr.bf16.mxu0 %v147
  %424 = vmatpush1.bf16.msra.mxu0 %v146
  %425 = vmatprep.subr.bf16.mxu0 %v150
  %426 = vmatpush1.bf16.msra.mxu0 %v149
  %427 = vmatprep.subr.bf16.mxu0 %v153
  %428 = vmatpush1.bf16.msra.mxu0 %v152
  %429 = vmatprep.subr.bf16.mxu0 %v156
  %430 = vmatpush1.bf16.msra.mxu0 %v155
  %431 = vmatprep.subr.bf16.mxu0 %v159
  %432 = vmatpush1.bf16.msra.mxu0 %v158
  %433 = vmatprep.subr.bf16.mxu0 %v162
  %434 = vmatpush1.bf16.msra.mxu0 %v161
  %435 = vmatprep.subr.bf16.mxu0 %v165
  %436 = vmatpush1.bf16.msra.mxu0 %v164
  %437 = vmatprep.subr.bf16.mxu0 %v168
  %438 = vmatpush1.bf16.msra.mxu0 %v167
  %439 = vmatprep.subr.bf16.mxu0 0
  %440 = vmatpush1.bf16.msra.mxu0 0
  %441 = vmatprep.subr.bf16.mxu0 0
  %442 = vmatpush1.bf16.msra.mxu0 0
  %443 = vmatprep.subr.bf16.mxu0 0
  %444 = vmatpush1.bf16.msra.mxu0 0
  %445 = vmatprep.subr.bf16.mxu0 0
  %446 = vmatpush1.bf16.msra.mxu0 0
  %447 = vmatprep.subr.bf16.mxu0 0
  %448 = vmatpush1.bf16.msra.mxu0 0
  %449 = vmatprep.subr.bf16.mxu0 0
  %450 = vmatpush1.bf16.msra.mxu0 0
  %451 = vmatprep.subr.bf16.mxu0 0
  %452 = vmatpush1.bf16.msra.mxu0 0
  %453 = vmatprep.subr.bf16.mxu0 0
  %454 = vmatpush1.bf16.msra.mxu0 0
  %455 = vmatprep.mubr.bf16.mxu0 0
  %456 = vmatmul.mubr.bf16.gmra.mrb[0].mxu0 %v414
  %v457 = vpop.f32.mrb[0].mxu0
  %v458 = vadd.f32 0.0, %v457
  %v459 = vpop.f32.mrb[0].mxu0
  %v460 = vadd.f32 0.0, %v459
  %v461 = vpop.f32.mrb[0].mxu0
  %v462 = vpop.f32.mrb[0].mxu0
  %463 = vdwg.mxu0
  %464 = vmatprep.subr.bf16.mxu0 0
  %465 = vmatpush1.bf16.msra.mxu0 %v148
  %466 = vmatprep.subr.bf16.mxu0 0
  %467 = vmatpush1.bf16.msra.mxu0 %v151
  %468 = vmatprep.subr.bf16.mxu0 0
  %469 = vmatpush1.bf16.msra.mxu0 %v154
  %470 = vmatprep.subr.bf16.mxu0 0
  %471 = vmatpush1.bf16.msra.mxu0 %v157
  %472 = vmatprep.subr.bf16.mxu0 0
  %473 = vmatpush1.bf16.msra.mxu0 %v160
  %474 = vmatprep.subr.bf16.mxu0 0
  %475 = vmatpush1.bf16.msra.mxu0 %v163
  %476 = vmatprep.subr.bf16.mxu0 0
  %477 = vmatpush1.bf16.msra.mxu0 %v166
  %478 = vmatprep.subr.bf16.mxu0 0
  %479 = vmatpush1.bf16.msra.mxu0 %v169
  %480 = vmatprep.subr.bf16.mxu0 0
  %481 = vmatpush1.bf16.msra.mxu0 0
  %482 = vmatprep.subr.bf16.mxu0 0
  %483 = vmatpush1.bf16.msra.mxu0 0
  %484 = vmatprep.subr.bf16.mxu0 0
  %485 = vmatpush1.bf16.msra.mxu0 0
  %486 = vmatprep.subr.bf16.mxu0 0
  %487 = vmatpush1.bf16.msra.mxu0 0
  %488 = vmatprep.subr.bf16.mxu0 0
  %489 = vmatpush1.bf16.msra.mxu0 0
  %490 = vmatprep.subr.bf16.mxu0 0
  %491 = vmatpush1.bf16.msra.mxu0 0
  %492 = vmatprep.subr.bf16.mxu0 0
  %493 = vmatpush1.bf16.msra.mxu0 0
  %494 = vmatprep.subr.bf16.mxu0 0
  %495 = vmatpush1.bf16.msra.mxu0 0
  %496 = vmatprep.mubr.bf16.mxu0 0
  %497 = vmatmul.mubr.bf16.gmra.mrb[0].mxu0 %v414
  %v498 = vpop.f32.mrb[0].mxu0
  %v499 = vadd.f32 0.0, %v498
  %v500 = vpop.f32.mrb[0].mxu0
  %v501 = vpop.f32.mrb[0].mxu0
  %v502 = vpop.f32.mrb[0].mxu0
  %503 = vdwg.mxu0
  %v504 = vadd.f32 %v420, %v458
  %v505 = vxor.u32 %v504, 2147483648
  %v506 = vmul.f32 %v505, 1.442695
  %v507 = vpow.pop %v506
  %v508 = vadd.f32 %v507, 1.0
  %v509 = vrcp.pop %v508
  %v510 = vmul.f32 1.0, %v509
  %v511 = vadd.f32 %v421, %v460
  %v512 = vxor.u32 %v511, 2147483648
  %v513 = vmul.f32 %v512, 1.442695
  %v514 = vpow.pop %v513
  %v515 = vadd.f32 %v514, 1.0
  %v516 = vrcp.pop %v515
  %v517 = vmul.f32 1.0, %v516
  %v518 = vadd.f32 %v499, %v293
  %v519 = vmul.f32 %v510, %v518
  %v520 = vadd.f32 %v422, %v519
  %v521 = vtanh.pop %v520
  %v522 = vsub.f32 1.0, %v517
  %v523 = vmul.f32 %v522, %v521
  %v524 = vmul.f32 %v517, %v413
  %v525 = vadd.f32 %v523, %v524
  %v526 = vpack.c.bf16 %v525, %v525
  %s527 = scalar_lea.vmem [#allocation3], 8
  %528 = vst [vmem:[%s527] sm:$0xf] %v526
  %s529 = scalar_lea.vmem %s0, 36
  %v530 = vld [vmem:[%s529] sm:$0xff]
  %v531 = vld [vmem:[%s529 + $0x8] sm:$0xf]
  %v532 = vunpack.c.l.bf16 %v530
  %v533 = vunpack.c.h.bf16 %v530
  %v534 = vunpack.c.l.bf16 %v531
  %535 = vmatprep.subr.bf16.mxu0 %v147
  %536 = vmatpush1.bf16.msra.mxu0 %v146
  %537 = vmatprep.subr.bf16.mxu0 %v150
  %538 = vmatpush1.bf16.msra.mxu0 %v149
  %539 = vmatprep.subr.bf16.mxu0 %v153
  %540 = vmatpush1.bf16.msra.mxu0 %v152
  %541 = vmatprep.subr.bf16.mxu0 %v156
  %542 = vmatpush1.bf16.msra.mxu0 %v155
  %543 = vmatprep.subr.bf16.mxu0 %v159
  %544 = vmatpush1.bf16.msra.mxu0 %v158
  %545 = vmatprep.subr.bf16.mxu0 %v162
  %546 = vmatpush1.bf16.msra.mxu0 %v161
  %547 = vmatprep.subr.bf16.mxu0 %v165
  %548 = vmatpush1.bf16.msra.mxu0 %v164
  %549 = vmatprep.subr.bf16.mxu0 %v168
  %550 = vmatpush1.bf16.msra.mxu0 %v167
  %551 = vmatprep.subr.bf16.mxu0 0
  %552 = vmatpush1.bf16.msra.mxu0 0
  %553 = vmatprep.subr.bf16.mxu0 0
  %554 = vmatpush1.bf16.msra.mxu0 0
  %555 = vmatprep.subr.bf16.mxu0 0
  %556 = vmatpush1.bf16.msra.mxu0 0
  %557 = vmatprep.subr.bf16.mxu0 0
  %558 = vmatpush1.bf16.msra.mxu0 0
  %559 = vmatprep.subr.bf16.mxu0 0
  %560 = vmatpush1.bf16.msra.mxu0 0
  %561 = vmatprep.subr.bf16.mxu0 0
  %562 = vmatpush1.bf16.msra.mxu0 0
  %563 = vmatprep.subr.bf16.mxu0 0
  %564 = vmatpush1.bf16.msra.mxu0 0
  %565 = vmatprep.subr.bf16.mxu0 0
  %566 = vmatpush1.bf16.msra.mxu0 0
  %567 = vmatprep.mubr.bf16.mxu0 0
  %568 = vmatmul.mubr.bf16.gmra.mrb[0].mxu0 %v526
  %v569 = vpop.f32.mrb[0].mxu0
  %v570 = vadd.f32 0.0, %v569
  %v571 = vpop.f32.mrb[0].mxu0
  %v572 = vadd.f32 0.0, %v571
  %v573 = vpop.f32.mrb[0].mxu0
  %v574 = vpop.f32.mrb[0].mxu0
  %575 = vdwg.mxu0
  %576 = vmatprep.subr.bf16.mxu0 0
  %577 = vmatpush1.bf16.msra.mxu0 %v148
  %578 = vmatprep.subr.bf16.mxu0 0
  %579 = vmatpush1.bf16.msra.mxu0 %v151
  %580 = vmatprep.subr.bf16.mxu0 0
  %581 = vmatpush1.bf16.msra.mxu0 %v154
  %582 = vmatprep.subr.bf16.mxu0 0
  %583 = vmatpush1.bf16.msra.mxu0 %v157
  %584 = vmatprep.subr.bf16.mxu0 0
  %585 = vmatpush1.bf16.msra.mxu0 %v160
  %586 = vmatprep.subr.bf16.mxu0 0
  %587 = vmatpush1.bf16.msra.mxu0 %v163
  %588 = vmatprep.subr.bf16.mxu0 0
  %589 = vmatpush1.bf16.msra.mxu0 %v166
  %590 = vmatprep.subr.bf16.mxu0 0
  %591 = vmatpush1.bf16.msra.mxu0 %v169
  %592 = vmatprep.subr.bf16.mxu0 0
  %593 = vmatpush1.bf16.msra.mxu0 0
  %594 = vmatprep.subr.bf16.mxu0 0
  %595 = vmatpush1.bf16.msra.mxu0 0
  %596 = vmatprep.subr.bf16.mxu0 0
  %597 = vmatpush1.bf16.msra.mxu0 0
  %598 = vmatprep.subr.bf16.mxu0 0
  %599 = vmatpush1.bf16.msra.mxu0 0
  %600 = vmatprep.subr.bf16.mxu0 0
  %601 = vmatpush1.bf16.msra.mxu0 0
  %602 = vmatprep.subr.bf16.mxu0 0
  %603 = vmatpush1.bf16.msra.mxu0 0
  %604 = vmatprep.subr.bf16.mxu0 0
  %605 = vmatpush1.bf16.msra.mxu0 0
  %606 = vmatprep.subr.bf16.mxu0 0
  %607 = vmatpush1.bf16.msra.mxu0 0
  %608 = vmatprep.mubr.bf16.mxu0 0
  %609 = vmatmul.mubr.bf16.gmra.mrb[0].mxu0 %v526
  %v610 = vpop.f32.mrb[0].mxu0
  %v611 = vadd.f32 0.0, %v610
  %v612 = vpop.f32.mrb[0].mxu0
  %v613 = vpop.f32.mrb[0].mxu0
  %v614 = vpop.f32.mrb[0].mxu0
  %615 = vdwg.mxu0
  %v616 = vadd.f32 %v532, %v570
  %v617 = vxor.u32 %v616, 2147483648
  %v618 = vmul.f32 %v617, 1.442695
  %v619 = vpow.pop %v618
  %v620 = vadd.f32 %v619, 1.0
  %v621 = vrcp.pop %v620
  %v622 = vmul.f32 1.0, %v621
  %v623 = vadd.f32 %v533, %v572
  %v624 = vxor.u32 %v623, 2147483648
  %v625 = vmul.f32 %v624, 1.442695
  %v626 = vpow.pop %v625
  %v627 = vadd.f32 %v626, 1.0
  %v628 = vrcp.pop %v627
  %v629 = vmul.f32 1.0, %v628
  %v630 = vadd.f32 %v611, %v293
  %v631 = vmul.f32 %v622, %v630
  %v632 = vadd.f32 %v534, %v631
  %v633 = vtanh.pop %v632
  %v634 = vsub.f32 1.0, %v629
  %v635 = vmul.f32 %v634, %v633
  %v636 = vmul.f32 %v629, %v525
  %v637 = vadd.f32 %v635, %v636
  %v638 = vpack.c.bf16 %v637, %v637
  %s639 = scalar_lea.vmem [#allocation3], 12
  %640 = vst [vmem:[%s639] sm:$0xf] %v638
  %s641 = scalar_lea.vmem %s0, 48
  %v642 = vld [vmem:[%s641] sm:$0xff]
  %v643 = vld [vmem:[%s641 + $0x8] sm:$0xf]
  %v644 = vunpack.c.l.bf16 %v642
  %v645 = vunpack.c.h.bf16 %v642
  %v646 = vunpack.c.l.bf16 %v643
  %647 = vmatprep.subr.bf16.mxu0 %v147
  %648 = vmatpush1.bf16.msra.mxu0 %v146
  %649 = vmatprep.subr.bf16.mxu0 %v150
  %650 = vmatpush1.bf16.msra.mxu0 %v149
  %651 = vmatprep.subr.bf16.mxu0 %v153
  %652 = vmatpush1.bf16.msra.mxu0 %v152
  %653 = vmatprep.subr.bf16.mxu0 %v156
  %654 = vmatpush1.bf16.msra.mxu0 %v155
  %655 = vmatprep.subr.bf16.mxu0 %v159
  %656 = vmatpush1.bf16.msra.mxu0 %v158
  %657 = vmatprep.subr.bf16.mxu0 %v162
  %658 = vmatpush1.bf16.msra.mxu0 %v161
  %659 = vmatprep.subr.bf16.mxu0 %v165
  %660 = vmatpush1.bf16.msra.mxu0 %v164
  %661 = vmatprep.subr.bf16.mxu0 %v168
  %662 = vmatpush1.bf16.msra.mxu0 %v167
  %663 = vmatprep.subr.bf16.mxu0 0
  %664 = vmatpush1.bf16.msra.mxu0 0
  %665 = vmatprep.subr.bf16.mxu0 0
  %666 = vmatpush1.bf16.msra.mxu0 0
  %667 = vmatprep.subr.bf16.mxu0 0
  %668 = vmatpush1.bf16.msra.mxu0 0
  %669 = vmatprep.subr.bf16.mxu0 0
  %670 = vmatpush1.bf16.msra.mxu0 0
  %671 = vmatprep.subr.bf16.mxu0 0
  %672 = vmatpush1.bf16.msra.mxu0 0
  %673 = vmatprep.subr.bf16.mxu0 0
  %674 = vmatpush1.bf16.msra.mxu0 0
  %675 = vmatprep.subr.bf16.mxu0 0
  %676 = vmatpush1.bf16.msra.mxu0 0
  %677 = vmatprep.subr.bf16.mxu0 0
  %678 = vmatpush1.bf16.msra.mxu0 0
  %679 = vmatprep.mubr.bf16.mxu0 0
  %680 = vmatmul.mubr.bf16.gmra.mrb[0].mxu0 %v638
  %v681 = vpop.f32.mrb[0].mxu0
  %v682 = vadd.f32 0.0, %v681
  %v683 = vpop.f32.mrb[0].mxu0
  %v684 = vadd.f32 0.0, %v683
  %v685 = vpop.f32.mrb[0].mxu0
  %v686 = vpop.f32.mrb[0].mxu0
  %687 = vdwg.mxu0
  %688 = vmatprep.subr.bf16.mxu0 0
  %689 = vmatpush1.bf16.msra.mxu0 %v148
  %690 = vmatprep.subr.bf16.mxu0 0
  %691 = vmatpush1.bf16.msra.mxu0 %v151
  %692 = vmatprep.subr.bf16.mxu0 0
  %693 = vmatpush1.bf16.msra.mxu0 %v154
  %694 = vmatprep.subr.bf16.mxu0 0
  %695 = vmatpush1.bf16.msra.mxu0 %v157
  %696 = vmatprep.subr.bf16.mxu0 0
  %697 = vmatpush1.bf16.msra.mxu0 %v160
  %698 = vmatprep.subr.bf16.mxu0 0
  %699 = vmatpush1.bf16.msra.mxu0 %v163
  %700 = vmatprep.subr.bf16.mxu0 0
  %701 = vmatpush1.bf16.msra.mxu0 %v166
  %702 = vmatprep.subr.bf16.mxu0 0
  %703 = vmatpush1.bf16.msra.mxu0 %v169
  %704 = vmatprep.subr.bf16.mxu0 0
  %705 = vmatpush1.bf16.msra.mxu0 0
  %706 = vmatprep.subr.bf16.mxu0 0
  %707 = vmatpush1.bf16.msra.mxu0 0
  %708 = vmatprep.subr.bf16.mxu0 0
  %709 = vmatpush1.bf16.msra.mxu0 0
  %710 = vmatprep.subr.bf16.mxu0 0
  %711 = vmatpush1.bf16.msra.mxu0 0
  %712 = vmatprep.subr.bf16.mxu0 0
  %713 = vmatpush1.bf16.msra.mxu0 0
  %714 = vmatprep.subr.bf16.mxu0 0
  %715 = vmatpush1.bf16.msra.mxu0 0
  %716 = vmatprep.subr.bf16.mxu0 0
  %717 = vmatpush1.bf16.msra.mxu0 0
  %718 = vmatprep.subr.bf16.mxu0 0
  %719 = vmatpush1.bf16.msra.mxu0 0
  %720 = vmatprep.mubr.bf16.mxu0 0
  %721 = vmatmul.mubr.bf16.gmra.mrb[0].mxu0 %v638
  %v722 = vpop.f32.mrb[0].mxu0
  %v723 = vadd.f32 0.0, %v722
  %v724 = vpop.f32.mrb[0].mxu0
  %v725 = vpop.f32.mrb[0].mxu0
  %v726 = vpop.f32.mrb[0].mxu0
  %727 = vdwg.mxu0
  %v728 = vadd.f32 %v644, %v682
  %v729 = vxor.u32 %v728, 2147483648
  %v730 = vmul.f32 %v729, 1.442695
  %v731 = vpow.pop %v730
  %v732 = vadd.f32 %v731, 1.0
  %v733 = vrcp.pop %v732
  %v734 = vmul.f32 1.0, %v733
  %v735 = vadd.f32 %v645, %v684
  %v736 = vxor.u32 %v735, 2147483648
  %v737 = vmul.f32 %v736, 1.442695
  %v738 = vpow.pop %v737
  %v739 = vadd.f32 %v738, 1.0
  %v740 = vrcp.pop %v739
  %v741 = vmul.f32 1.0, %v740
  %v742 = vadd.f32 %v723, %v293
  %v743 = vmul.f32 %v734, %v742
  %v744 = vadd.f32 %v646, %v743
  %v745 = vtanh.pop %v744
  %v746 = vsub.f32 1.0, %v741
  %v747 = vmul.f32 %v746, %v745
  %v748 = vmul.f32 %v741, %v637
  %v749 = vadd.f32 %v747, %v748
  %v750 = vpack.c.bf16 %v749, %v749
  %s751 = scalar_lea.vmem [#allocation3], 16
  %752 = vst [vmem:[%s751] sm:$0xf] %v750
  %s753 = scalar_lea.vmem %s0, 60
  %v754 = vld [vmem:[%s753] sm:$0xff]
  %v755 = vld [vmem:[%s753 + $0x8] sm:$0xf]
  %v756 = vunpack.c.l.bf16 %v754
  %v757 = vunpack.c.h.bf16 %v754
  %v758 = vunpack.c.l.bf16 %v755
  %759 = vmatprep.subr.bf16.mxu0 %v147
  %760 = vmatpush1.bf16.msra.mxu0 %v146
  %761 = vmatprep.subr.bf16.mxu0 %v150
  %762 = vmatpush1.bf16.msra.mxu0 %v149
  %763 = vmatprep.subr.bf16.mxu0 %v153
  %764 = vmatpush1.bf16.msra.mxu0 %v152
  %765 = vmatprep.subr.bf16.mxu0 %v156
  %766 = vmatpush1.bf16.msra.mxu0 %v155
  %767 = vmatprep.subr.bf16.mxu0 %v159
  %768 = vmatpush1.bf16.msra.mxu0 %v158
  %769 = vmatprep.subr.bf16.mxu0 %v162
  %770 = vmatpush1.bf16.msra.mxu0 %v161
  %771 = vmatprep.subr.bf16.mxu0 %v165
  %772 = vmatpush1.bf16.msra.mxu0 %v164
  %773 = vmatprep.subr.bf16.mxu0 %v168
  %774 = vmatpush1.bf16.msra.mxu0 %v167
  %775 = vmatprep.subr.bf16.mxu0 0
  %776 = vmatpush1.bf16.msra.mxu0 0
  %777 = vmatprep.subr.bf16.mxu0 0
  %778 = vmatpush1.bf16.msra.mxu0 0
  %779 = vmatprep.subr.bf16.mxu0 0
  %780 = vmatpush1.bf16.msra.mxu0 0
  %781 = vmatprep.subr.bf16.mxu0 0
  %782 = vmatpush1.bf16.msra.mxu0 0
  %783 = vmatprep.subr.bf16.mxu0 0
  %784 = vmatpush1.bf16.msra.mxu0 0
  %785 = vmatprep.subr.bf16.mxu0 0
  %786 = vmatpush1.bf16.msra.mxu0 0
  %787 = vmatprep.subr.bf16.mxu0 0
  %788 = vmatpush1.bf16.msra.mxu0 0
  %789 = vmatprep.subr.bf16.mxu0 0
  %790 = vmatpush1.bf16.msra.mxu0 0
  %791 = vmatprep.mubr.bf16.mxu0 0
  %792 = vmatmul.mubr.bf16.gmra.mrb[0].mxu0 %v750
  %v793 = vpop.f32.mrb[0].mxu0
  %v794 = vadd.f32 0.0, %v793
  %v795 = vpop.f32.mrb[0].mxu0
  %v796 = vadd.f32 0.0, %v795
  %v797 = vpop.f32.mrb[0].mxu0
  %v798 = vpop.f32.mrb[0].mxu0
  %799 = vdwg.mxu0
  %800 = vmatprep.subr.bf16.mxu0 0
  %801 = vmatpush1.bf16.msra.mxu0 %v148
  %802 = vmatprep.subr.bf16.mxu0 0
  %803 = vmatpush1.bf16.msra.mxu0 %v151
  %804 = vmatprep.subr.bf16.mxu0 0
  %805 = vmatpush1.bf16.msra.mxu0 %v154
  %806 = vmatprep.subr.bf16.mxu0 0
  %807 = vmatpush1.bf16.msra.mxu0 %v157
  %808 = vmatprep.subr.bf16.mxu0 0
  %809 = vmatpush1.bf16.msra.mxu0 %v160
  %810 = vmatprep.subr.bf16.mxu0 0
  %811 = vmatpush1.bf16.msra.mxu0 %v163
  %812 = vmatprep.subr.bf16.mxu0 0
  %813 = vmatpush1.bf16.msra.mxu0 %v166
  %814 = vmatprep.subr.bf16.mxu0 0
  %815 = vmatpush1.bf16.msra.mxu0 %v169
  %816 = vmatprep.subr.bf16.mxu0 0
  %817 = vmatpush1.bf16.msra.mxu0 0
  %818 = vmatprep.subr.bf16.mxu0 0
  %819 = vmatpush1.bf16.msra.mxu0 0
  %820 = vmatprep.subr.bf16.mxu0 0
  %821 = vmatpush1.bf16.msra.mxu0 0
  %822 = vmatprep.subr.bf16.mxu0 0
  %823 = vmatpush1.bf16.msra.mxu0 0
  %824 = vmatprep.subr.bf16.mxu0 0
  %825 = vmatpush1.bf16.msra.mxu0 0
  %826 = vmatprep.subr.bf16.mxu0 0
  %827 = vmatpush1.bf16.msra.mxu0 0
  %828 = vmatprep.subr.bf16.mxu0 0
  %829 = vmatpush1.bf16.msra.mxu0 0
  %830 = vmatprep.subr.bf16.mxu0 0
  %831 = vmatpush1.bf16.msra.mxu0 0
  %832 = vmatprep.mubr.bf16.mxu0 0
  %833 = vmatmul.mubr.bf16.gmra.mrb[0].mxu0 %v750
  %v834 = vpop.f32.mrb[0].mxu0
  %v835 = vadd.f32 0.0, %v834
  %v836 = vpop.f32.mrb[0].mxu0
  %v837 = vpop.f32.mrb[0].mxu0
  %v838 = vpop.f32.mrb[0].mxu0
  %839 = vdwg.mxu0
  %v840 = vadd.f32 %v756, %v794
  %v841 = vxor.u32 %v840, 2147483648
  %v842 = vmul.f32 %v841, 1.442695
  %v843 = vpow.pop %v842
  %v844 = vadd.f32 %v843, 1.0
  %v845 = vrcp.pop %v844
  %v846 = vmul.f32 1.0, %v845
  %v847 = vadd.f32 %v757, %v796
  %v848 = vxor.u32 %v847, 2147483648
  %v849 = vmul.f32 %v848, 1.442695
  %v850 = vpow.pop %v849
  %v851 = vadd.f32 %v850, 1.0
  %v852 = vrcp.pop %v851
  %v853 = vmul.f32 1.0, %v852
  %v854 = vadd.f32 %v835, %v293
  %v855 = vmul.f32 %v846, %v854
  %v856 = vadd.f32 %v758, %v855
  %v857 = vtanh.pop %v856
  %v858 = vsub.f32 1.0, %v853
  %v859 = vmul.f32 %v858, %v857
  %v860 = vmul.f32 %v853, %v749
  %v861 = vadd.f32 %v859, %v860
  %v862 = vpack.c.bf16 %v861, %v861
  %s863 = scalar_lea.vmem [#allocation3], 20
  %864 = vst [vmem:[%s863] sm:$0xf] %v862
  %s865 = scalar_lea.vmem %s0, 72
  %v866 = vld [vmem:[%s865] sm:$0xff]
  %v867 = vld [vmem:[%s865 + $0x8] sm:$0xf]
  %v868 = vunpack.c.l.bf16 %v866
  %v869 = vunpack.c.h.bf16 %v866
  %v870 = vunpack.c.l.bf16 %v867
  %871 = vmatprep.subr.bf16.mxu0 %v147
  %872 = vmatpush1.bf16.msra.mxu0 %v146
  %873 = vmatprep.subr.bf16.mxu0 %v150
  %874 = vmatpush1.bf16.msra.mxu0 %v149
  %875 = vmatprep.subr.bf16.mxu0 %v153
  %876 = vmatpush1.bf16.msra.mxu0 %v152
  %877 = vmatprep.subr.bf16.mxu0 %v156
  %878 = vmatpush1.bf16.msra.mxu0 %v155
  %879 = vmatprep.subr.bf16.mxu0 %v159
  %880 = vmatpush1.bf16.msra.mxu0 %v158
  %881 = vmatprep.subr.bf16.mxu0 %v162
  %882 = vmatpush1.bf16.msra.mxu0 %v161
  %883 = vmatprep.subr.bf16.mxu0 %v165
  %884 = vmatpush1.bf16.msra.mxu0 %v164
  %885 = vmatprep.subr.bf16.mxu0 %v168
  %886 = vmatpush1.bf16.msra.mxu0 %v167
  %887 = vmatprep.subr.bf16.mxu0 0
  %888 = vmatpush1.bf16.msra.mxu0 0
  %889 = vmatprep.subr.bf16.mxu0 0
  %890 = vmatpush1.bf16.msra.mxu0 0
  %891 = vmatprep.subr.bf16.mxu0 0
  %892 = vmatpush1.bf16.msra.mxu0 0
  %893 = vmatprep.subr.bf16.mxu0 0
  %894 = vmatpush1.bf16.msra.mxu0 0
  %895 = vmatprep.subr.bf16.mxu0 0
  %896 = vmatpush1.bf16.msra.mxu0 0
  %897 = vmatprep.subr.bf16.mxu0 0
  %898 = vmatpush1.bf16.msra.mxu0 0
  %899 = vmatprep.subr.bf16.mxu0 0
  %900 = vmatpush1.bf16.msra.mxu0 0
  %901 = vmatprep.subr.bf16.mxu0 0
  %902 = vmatpush1.bf16.msra.mxu0 0
  %903 = vmatprep.mubr.bf16.mxu0 0
  %904 = vmatmul.mubr.bf16.gmra.mrb[0].mxu0 %v862
  %v905 = vpop.f32.mrb[0].mxu0
  %v906 = vadd.f32 0.0, %v905
  %v907 = vpop.f32.mrb[0].mxu0
  %v908 = vadd.f32 0.0, %v907
  %v909 = vpop.f32.mrb[0].mxu0
  %v910 = vpop.f32.mrb[0].mxu0
  %911 = vdwg.mxu0
  %912 = vmatprep.subr.bf16.mxu0 0
  %913 = vmatpush1.bf16.msra.mxu0 %v148
  %914 = vmatprep.subr.bf16.mxu0 0
  %915 = vmatpush1.bf16.msra.mxu0 %v151
  %916 = vmatprep.subr.bf16.mxu0 0
  %917 = vmatpush1.bf16.msra.mxu0 %v154
  %918 = vmatprep.subr.bf16.mxu0 0
  %919 = vmatpush1.bf16.msra.mxu0 %v157
  %920 = vmatprep.subr.bf16.mxu0 0
  %921 = vmatpush1.bf16.msra.mxu0 %v160
  %922 = vmatprep.subr.bf16.mxu0 0
  %923 = vmatpush1.bf16.msra.mxu0 %v163
  %924 = vmatprep.subr.bf16.mxu0 0
  %925 = vmatpush1.bf16.msra.mxu0 %v166
  %926 = vmatprep.subr.bf16.mxu0 0
  %927 = vmatpush1.bf16.msra.mxu0 %v169
  %928 = vmatprep.subr.bf16.mxu0 0
  %929 = vmatpush1.bf16.msra.mxu0 0
  %930 = vmatprep.subr.bf16.mxu0 0
  %931 = vmatpush1.bf16.msra.mxu0 0
  %932 = vmatprep.subr.bf16.mxu0 0
  %933 = vmatpush1.bf16.msra.mxu0 0
  %934 = vmatprep.subr.bf16.mxu0 0
  %935 = vmatpush1.bf16.msra.mxu0 0
  %936 = vmatprep.subr.bf16.mxu0 0
  %937 = vmatpush1.bf16.msra.mxu0 0
  %938 = vmatprep.subr.bf16.mxu0 0
  %939 = vmatpush1.bf16.msra.mxu0 0
  %940 = vmatprep.subr.bf16.mxu0 0
  %941 = vmatpush1.bf16.msra.mxu0 0
  %942 = vmatprep.subr.bf16.mxu0 0
  %943 = vmatpush1.bf16.msra.mxu0 0
  %944 = vmatprep.mubr.bf16.mxu0 0
  %945 = vmatmul.mubr.bf16.gmra.mrb[0].mxu0 %v862
  %v946 = vpop.f32.mrb[0].mxu0
  %v947 = vadd.f32 0.0, %v946
  %v948 = vpop.f32.mrb[0].mxu0
  %v949 = vpop.f32.mrb[0].mxu0
  %v950 = vpop.f32.mrb[0].mxu0
  %951 = vdwg.mxu0
  %v952 = vadd.f32 %v868, %v906
  %v953 = vxor.u32 %v952, 2147483648
  %v954 = vmul.f32 %v953, 1.442695
  %v955 = vpow.pop %v954
  %v956 = vadd.f32 %v955, 1.0
  %v957 = vrcp.pop %v956
  %v958 = vmul.f32 1.0, %v957
  %v959 = vadd.f32 %v869, %v908
  %v960 = vxor.u32 %v959, 2147483648
  %v961 = vmul.f32 %v960, 1.442695
  %v962 = vpow.pop %v961
  %v963 = vadd.f32 %v962, 1.0
  %v964 = vrcp.pop %v963
  %v965 = vmul.f32 1.0, %v964
  %v966 = vadd.f32 %v947, %v293
  %v967 = vmul.f32 %v958, %v966
  %v968 = vadd.f32 %v870, %v967
  %v969 = vtanh.pop %v968
  %v970 = vsub.f32 1.0, %v965
  %v971 = vmul.f32 %v970, %v969
  %v972 = vmul.f32 %v965, %v861
  %v973 = vadd.f32 %v971, %v972
  %v974 = vpack.c.bf16 %v973, %v973
  %s975 = scalar_lea.vmem [#allocation3], 24
  %976 = vst [vmem:[%s975] sm:$0xf] %v974
  %s977 = scalar_lea.vmem %s0, 84
  %v978 = vld [vmem:[%s977] sm:$0xff]
  %v979 = vld [vmem:[%s977 + $0x8] sm:$0xf]
  %v980 = vunpack.c.l.bf16 %v978
  %v981 = vunpack.c.h.bf16 %v978
  %v982 = vunpack.c.l.bf16 %v979
  %983 = vmatprep.subr.bf16.mxu0 %v147
  %984 = vmatpush1.bf16.msra.mxu0 %v146
  %985 = vmatprep.subr.bf16.mxu0 %v150
  %986 = vmatpush1.bf16.msra.mxu0 %v149
  %987 = vmatprep.subr.bf16.mxu0 %v153
  %988 = vmatpush1.bf16.msra.mxu0 %v152
  %989 = vmatprep.subr.bf16.mxu0 %v156
  %990 = vmatpush1.bf16.msra.mxu0 %v155
  %991 = vmatprep.subr.bf16.mxu0 %v159
  %992 = vmatpush1.bf16.msra.mxu0 %v158
  %993 = vmatprep.subr.bf16.mxu0 %v162
  %994 = vmatpush1.bf16.msra.mxu0 %v161
  %995 = vmatprep.subr.bf16.mxu0 %v165
  %996 = vmatpush1.bf16.msra.mxu0 %v164
  %997 = vmatprep.subr.bf16.mxu0 %v168
  %998 = vmatpush1.bf16.msra.mxu0 %v167
  %999 = vmatprep.subr.bf16.mxu0 0
  %1000 = vmatpush1.bf16.msra.mxu0 0
  %1001 = vmatprep.subr.bf16.mxu0 0
  %1002 = vmatpush1.bf16.msra.mxu0 0
  %1003 = vmatprep.subr.bf16.mxu0 0
  %1004 = vmatpush1.bf16.msra.mxu0 0
  %1005 = vmatprep.subr.bf16.mxu0 0
  %1006 = vmatpush1.bf16.msra.mxu0 0
  %1007 = vmatprep.subr.bf16.mxu0 0
  %1008 = vmatpush1.bf16.msra.mxu0 0
  %1009 = vmatprep.subr.bf16.mxu0 0
  %1010 = vmatpush1.bf16.msra.mxu0 0
  %1011 = vmatprep.subr.bf16.mxu0 0
  %1012 = vmatpush1.bf16.msra.mxu0 0
  %1013 = vmatprep.subr.bf16.mxu0 0
  %1014 = vmatpush1.bf16.msra.mxu0 0
  %1015 = vmatprep.mubr.bf16.mxu0 0
  %1016 = vmatmul.mubr.bf16.gmra.mrb[0].mxu0 %v974
  %v1017 = vpop.f32.mrb[0].mxu0
  %v1018 = vadd.f32 0.0, %v1017
  %v1019 = vpop.f32.mrb[0].mxu0
  %v1020 = vadd.f32 0.0, %v1019
  %v1021 = vpop.f32.mrb[0].mxu0
  %v1022 = vpop.f32.mrb[0].mxu0
  %1023 = vdwg.mxu0
  %1024 = vmatprep.subr.bf16.mxu0 0
  %1025 = vmatpush1.bf16.msra.mxu0 %v148
  %1026 = vmatprep.subr.bf16.mxu0 0
  %1027 = vmatpush1.bf16.msra.mxu0 %v151
  %1028 = vmatprep.subr.bf16.mxu0 0
  %1029 = vmatpush1.bf16.msra.mxu0 %v154
  %1030 = vmatprep.subr.bf16.mxu0 0
  %1031 = vmatpush1.bf16.msra.mxu0 %v157
  %1032 = vmatprep.subr.bf16.mxu0 0
  %1033 = vmatpush1.bf16.msra.mxu0 %v160
  %1034 = vmatprep.subr.bf16.mxu0 0
  %1035 = vmatpush1.bf16.msra.mxu0 %v163
  %1036 = vmatprep.subr.bf16.mxu0 0
  %1037 = vmatpush1.bf16.msra.mxu0 %v166
  %1038 = vmatprep.subr.bf16.mxu0 0
  %1039 = vmatpush1.bf16.msra.mxu0 %v169
  %1040 = vmatprep.subr.bf16.mxu0 0
  %1041 = vmatpush1.bf16.msra.mxu0 0
  %1042 = vmatprep.subr.bf16.mxu0 0
  %1043 = vmatpush1.bf16.msra.mxu0 0
  %1044 = vmatprep.subr.bf16.mxu0 0
  %1045 = vmatpush1.bf16.msra.mxu0 0
  %1046 = vmatprep.subr.bf16.mxu0 0
  %1047 = vmatpush1.bf16.msra.mxu0 0
  %1048 = vmatprep.subr.bf16.mxu0 0
  %1049 = vmatpush1.bf16.msra.mxu0 0
  %1050 = vmatprep.subr.bf16.mxu0 0
  %1051 = vmatpush1.bf16.msra.mxu0 0
  %1052 = vmatprep.subr.bf16.mxu0 0
  %1053 = vmatpush1.bf16.msra.mxu0 0
  %1054 = vmatprep.subr.bf16.mxu0 0
  %1055 = vmatpush1.bf16.msra.mxu0 0
  %1056 = vmatprep.mubr.bf16.mxu0 0
  %1057 = vmatmul.mubr.bf16.gmra.mrb[0].mxu0 %v974
  %v1058 = vpop.f32.mrb[0].mxu0
  %v1059 = vadd.f32 0.0, %v1058
  %v1060 = vpop.f32.mrb[0].mxu0
  %v1061 = vpop.f32.mrb[0].mxu0
  %v1062 = vpop.f32.mrb[0].mxu0
  %1063 = vdwg.mxu0
  %v1064 = vadd.f32 %v980, %v1018
  %v1065 = vxor.u32 %v1064, 2147483648
  %v1066 = vmul.f32 %v1065, 1.442695
  %v1067 = vpow.pop %v1066
  %v1068 = vadd.f32 %v1067, 1.0
  %v1069 = vrcp.pop %v1068
  %v1070 = vmul.f32 1.0, %v1069
  %v1071 = vadd.f32 %v981, %v1020
  %v1072 = vxor.u32 %v1071, 2147483648
  %v1073 = vmul.f32 %v1072, 1.442695
  %v1074 = vpow.pop %v1073
  %v1075 = vadd.f32 %v1074, 1.0
  %v1076 = vrcp.pop %v1075
  %v1077 = vmul.f32 1.0, %v1076
  %v1078 = vadd.f32 %v1059, %v293
  %v1079 = vmul.f32 %v1070, %v1078
  %v1080 = vadd.f32 %v982, %v1079
  %v1081 = vtanh.pop %v1080
  %v1082 = vsub.f32 1.0, %v1077
  %v1083 = vmul.f32 %v1082, %v1081
  %v1084 = vmul.f32 %v1077, %v973
  %v1085 = vadd.f32 %v1083, %v1084
  %v1086 = vpack.c.bf16 %v1085, %v1085
  %s1087 = scalar_lea.vmem [#allocation3], 28
  %1088 = vst [vmem:[%s1087] sm:$0xf] %v1086
  %1089 = vst [vmem:[#allocation2] sm:$0xff] %v1085
  %v1090 = vld [vmem:[#allocation3] sm:$0xf]
  %v1091 = vld [vmem:[#allocation3 + $0x4] sm:$0xf]
  %v1092 = vld [vmem:[#allocation3 + $0x8] sm:$0xf]
  %v1093 = vld [vmem:[#allocation3 + $0xc] sm:$0xf]
  %v1094 = vld [vmem:[#allocation3 + $0x10] sm:$0xf]
  %v1095 = vld [vmem:[#allocation3 + $0x14] sm:$0xf]
  %v1096 = vld [vmem:[#allocation3 + $0x18] sm:$0xf]
  %v1097 = vld [vmem:[#allocation3 + $0x1c] sm:$0xf]
  %v1098 = vld [vmem:[%s3] sm:$0xf]
  %v1099 = vld [vmem:[%s3 + $0x4] sm:$0xf]
  %v1100 = vld [vmem:[%s3 + $0x8] sm:$0xf]
  %v1101 = vld [vmem:[%s3 + $0xc] sm:$0xf]
  %v1102 = vld [vmem:[%s3 + $0x10] sm:$0xf]
  %v1103 = vld [vmem:[%s3 + $0x14] sm:$0xf]
  %v1104 = vld [vmem:[%s3 + $0x18] sm:$0xf]
  %v1105 = vld [vmem:[%s3 + $0x1c] sm:$0xf]
  %v1106 = vld [vmem:[%s3 + $0x20] sm:$0xf]
  %v1107 = vld [vmem:[%s3 + $0x24] sm:$0xf]
  %v1108 = vld [vmem:[%s3 + $0x28] sm:$0xf]
  %v1109 = vld [vmem:[%s3 + $0x2c] sm:$0xf]
  %v1110 = vld [vmem:[%s3 + $0x30] sm:$0xf]
  %v1111 = vld [vmem:[%s3 + $0x34] sm:$0xf]
  %v1112 = vld [vmem:[%s3 + $0x38] sm:$0xf]
  %v1113 = vld [vmem:[%s3 + $0x3c] sm:$0xf]
  %v1114 = vld [vmem:[%s4] sm:$0x1]
  %v1116 = vlaneseq
  %v1117 = vshrl.u32 %v1116, 7
  %v1118 = vsub.s32 0, %v1117
  %v1119 = vrot.slane %v1114, %v1118
  %v1129 = vunpack.c.l.b16 %v1090
  %v1130 = vunpack.c.l.b16 %v1091
  %v1131 = vunpack.c.l.b16 %v1092
  %v1132 = vunpack.c.l.b16 %v1093
  %v1133 = vunpack.c.l.b16 %v1094
  %v1134 = vunpack.c.l.b16 %v1095
  %v1135 = vunpack.c.l.b16 %v1096
  %v1136 = vunpack.c.l.b16 %v1097
  %v1137 = vpack.c.b16 %v1130, %v1129
  %v1138 = vpack.c.b16 %v1132, %v1131
  %v1139 = vpack.c.b16 %v1134, %v1133
  %v1140 = vpack.c.b16 %v1136, %v1135
  %v1161 = vunpack.c.l.b16 %v1098
  %v1162 = vunpack.c.l.b16 %v1099
  %v1163 = vunpack.c.l.b16 %v1100
  %v1164 = vunpack.c.l.b16 %v1101
  %v1165 = vunpack.c.l.b16 %v1102
  %v1166 = vunpack.c.l.b16 %v1103
  %v1167 = vunpack.c.l.b16 %v1104
  %v1168 = vunpack.c.l.b16 %v1105
  %v1169 = vunpack.c.l.b16 %v1106
  %v1170 = vunpack.c.l.b16 %v1107
  %v1171 = vunpack.c.l.b16 %v1108
  %v1172 = vunpack.c.l.b16 %v1109
  %v1173 = vunpack.c.l.b16 %v1110
  %v1174 = vunpack.c.l.b16 %v1111
  %v1175 = vunpack.c.l.b16 %v1112
  %v1176 = vunpack.c.l.b16 %v1113
  %v1177 = vpack.c.b16 %v1162, %v1161
  %v1178 = vpack.c.b16 %v1164, %v1163
  %v1179 = vpack.c.b16 %v1166, %v1165
  %v1180 = vpack.c.b16 %v1168, %v1167
  %v1181 = vpack.c.b16 %v1170, %v1169
  %v1182 = vpack.c.b16 %v1172, %v1171
  %v1183 = vpack.c.b16 %v1174, %v1173
  %v1184 = vpack.c.b16 %v1176, %v1175
  %1193 = vmatprep.subr.bf16.mxu0 0
  %1194 = vmatpush1.bf16.msra.mxu0 %v1177
  %1195 = vmatprep.subr.bf16.mxu0 0
  %1196 = vmatpush1.bf16.msra.mxu0 %v1178
  %1197 = vmatprep.subr.bf16.mxu0 0
  %1198 = vmatpush1.bf16.msra.mxu0 %v1179
  %1199 = vmatprep.subr.bf16.mxu0 0
  %1200 = vmatpush1.bf16.msra.mxu0 %v1180
  %1201 = vmatprep.subr.bf16.mxu0 0
  %1202 = vmatpush1.bf16.msra.mxu0 %v1181
  %1203 = vmatprep.subr.bf16.mxu0 0
  %1204 = vmatpush1.bf16.msra.mxu0 %v1182
  %1205 = vmatprep.subr.bf16.mxu0 0
  %1206 = vmatpush1.bf16.msra.mxu0 %v1183
  %1207 = vmatprep.subr.bf16.mxu0 0
  %1208 = vmatpush1.bf16.msra.mxu0 %v1184
  %1209 = vmatprep.subr.bf16.mxu0 0
  %1210 = vmatpush1.bf16.msra.mxu0 0
  %1211 = vmatprep.subr.bf16.mxu0 0
  %1212 = vmatpush1.bf16.msra.mxu0 0
  %1213 = vmatprep.subr.bf16.mxu0 0
  %1214 = vmatpush1.bf16.msra.mxu0 0
  %1215 = vmatprep.subr.bf16.mxu0 0
  %1216 = vmatpush1.bf16.msra.mxu0 0
  %1217 = vmatprep.subr.bf16.mxu0 0
  %1218 = vmatpush1.bf16.msra.mxu0 0
  %1219 = vmatprep.subr.bf16.mxu0 0
  %1220 = vmatpush1.bf16.msra.mxu0 0
  %1221 = vmatprep.subr.bf16.mxu0 0
  %1222 = vmatpush1.bf16.msra.mxu0 0
  %1223 = vmatprep.subr.bf16.mxu0 0
  %1224 = vmatpush1.bf16.msra.mxu0 0
  %1225 = vmatprep.mubr.bf16.mxu0 0
  %1226 = vmatmul.mubr.bf16.gmra.mrb[0].mxu0 %v1137
  %v1227 = vpop.f32.mrb[0].mxu0
  %v1228 = vadd.f32 %v1119, %v1227
  %v1229 = vpop.f32.mrb[0].mxu0
  %v1230 = vpop.f32.mrb[0].mxu0
  %v1231 = vadd.f32 %v1119, %v1230
  %v1232 = vpop.f32.mrb[0].mxu0
  %1233 = vmatprep.mubr.bf16.mxu0 0
  %1234 = vmatmul.mubr.bf16.gmra.mrb[0].mxu0 %v1138
  %v1235 = vpop.f32.mrb[0].mxu0
  %v1236 = vadd.f32 %v1119, %v1235
  %v1237 = vpop.f32.mrb[0].mxu0
  %v1238 = vpop.f32.mrb[0].mxu0
  %v1239 = vadd.f32 %v1119, %v1238
  %v1240 = vpop.f32.mrb[0].mxu0
  %1241 = vmatprep.mubr.bf16.mxu0 0
  %1242 = vmatmul.mubr.bf16.gmra.mrb[0].mxu0 %v1139
  %v1243 = vpop.f32.mrb[0].mxu0
  %v1244 = vadd.f32 %v1119, %v1243
  %v1245 = vpop.f32.mrb[0].mxu0
  %v1246 = vpop.f32.mrb[0].mxu0
  %v1247 = vadd.f32 %v1119, %v1246
  %v1248 = vpop.f32.mrb[0].mxu0
  %1249 = vmatprep.mubr.bf16.mxu0 0
  %1250 = vmatmul.mubr.bf16.gmra.mrb[0].mxu0 %v1140
  %v1251 = vpop.f32.mrb[0].mxu0
  %v1252 = vadd.f32 %v1119, %v1251
  %v1253 = vpop.f32.mrb[0].mxu0
  %v1254 = vpop.f32.mrb[0].mxu0
  %v1255 = vadd.f32 %v1119, %v1254
  %v1256 = vpop.f32.mrb[0].mxu0
  %1257 = vdwg.mxu0
  %1258 = vst [vmem:[%s5] sm:$0xff] %v1228
  %1259 = vst [vmem:[%s5 + $0x8] sm:$0xff] %v1231
  %1260 = vst [vmem:[%s5 + $0x10] sm:$0xff] %v1236
  %1261 = vst [vmem:[%s5 + $0x18] sm:$0xff] %v1239
  %1262 = vst [vmem:[%s5 + $0x20] sm:$0xff] %v1244
  %1263 = vst [vmem:[%s5 + $0x28] sm:$0xff] %v1247
  %1264 = vst [vmem:[%s5 + $0x30] sm:$0xff] %v1252
  %1265 = vst [vmem:[%s5 + $0x38] sm:$0xff] %v1255
  // Predicated region
  $region26: #{surname_generation_forward.1} parent=0 // pred_check
    _
  $region27: #{surname_generation_forward.1} parent=0 // pred_check_branch
    %1267 = sbr.rel (0) target = $region29
  $region28: #{surname_generation_forward.1} parent=0 // pred_region
    _
  $region29: #{surname_generation_forward.1} parent=0 // pred_fallthru
    _
  // Predicated region
  $region30: #{surname_generation_forward.1} parent=0 // pred_check
    _
  $region31: #{surname_generation_forward.1} parent=0 // pred_check_branch
    %1269 = sbr.rel (0) target = $region33
  $region32: #{surname_generation_forward.1} parent=0 // pred_region
    _
  $region33: #{surname_generation_forward.1} parent=0 // pred_fallthru
    _

</llo_original>
